<compile_context>
chip_gen: v6e
topology: v6e:2x2x1
jax: 0.10.0
libtpu: 0.0.40
codegen_flags: <defaults>
</compile_context>

<pallas_src>
import jax
import jax.numpy as jnp
from jax.experimental import pallas as pl
from jax.experimental.pallas import tpu as pltpu


def _ae_kernel(x_ref, w1_ref, b1_ref, w2_ref, b2_ref, w3_ref, b3_ref,
               o_ref, h1_acc):
    # Grid axis 0 tiles the layer-1 contraction dimension (input_size).
    k = pl.program_id(0)
    tk = w1_ref.shape[0]

    @pl.when(k == 0)
    def _():
        h1_acc[...] = jnp.zeros_like(h1_acc)

    # x is resident; slice the current K window out of the full row.
    x_tile = x_ref[:, pl.ds(pl.multiple_of(k * tk, 128), tk)]

    # Partial layer-1 product: (1, tk) @ (tk, hidden) -> (1, hidden), f32 acc.
    # w1 arrives as bf16 (halves its HBM bytes); upcast in-register is free
    # relative to the DMA floor and keeps the x-side of the dot exact.
    h1_acc[...] += jnp.dot(
        x_tile, w1_ref[...].astype(jnp.float32),
        preferred_element_type=jnp.float32,
    )

    @pl.when(k == pl.num_programs(0) - 1)
    def _():
        # layer1 bias + ReLU
        h1 = jnp.maximum(h1_acc[...] + b1_ref[...], 0.0)
        # layer2 + ReLU : (1, hidden) @ (hidden, code), f32 weights (tiny)
        h2 = jnp.dot(h1, w2_ref[...], preferred_element_type=jnp.float32)
        h2 = jnp.maximum(h2 + b2_ref[...], 0.0)
        # layer3 (no activation) : (1, code) @ (code, input_size), bf16 weights
        y = jnp.dot(h2, w3_ref[...].astype(jnp.float32),
                    preferred_element_type=jnp.float32)
        o_ref[...] = (y + b3_ref[...]).astype(o_ref.dtype)


def multilayer_autoencoder(x, params):
    """x: any shape; flattened to (input_size,).  Returns (input_size,) f32."""
    w1, b1, w2, b2, w3, b3 = params
    input_size = w1.shape[0]
    hidden_size = w1.shape[1]
    code_size = w2.shape[1]

    x_flat = x.reshape(-1).astype(jnp.float32)
    assert x_flat.shape[0] == input_size
    x_row = x_flat.reshape(1, input_size)

    # Dominant streams in bf16; everything else (and all accumulation) in f32.
    w1c = w1.astype(jnp.bfloat16)
    w3c = w3.astype(jnp.bfloat16)

    # Biases as (1, out) rows.
    b1r = b1.reshape(1, hidden_size).astype(jnp.float32)
    b2r = b2.reshape(1, code_size).astype(jnp.float32)
    b3r = b3.reshape(1, input_size).astype(jnp.float32)

    # Layer-1 K tile: split in two (kt=2) so one tile of w1 DMA overlaps with
    # compute while per-step overhead stays minimal.  Tile stays a multiple of
    # 128 lanes / 16 sublanes (bf16 packing); otherwise fall back to one block.
    if input_size % 256 == 0 and input_size >= 1024:
        tk = input_size // 2
    else:
        tk = input_size
    kt = input_size // tk

    # Rough VMEM budget check (double-buffered blocks + scratch).  Keeps us
    # well under v7x's 32 MiB default scoped / 64 MiB physical VMEM.
    vmem_bytes = (
        2 * tk * hidden_size * 2                 # streamed w1 tile (bf16, x2 buf)
        + 2 * input_size * 4                     # resident x row
        + 2 * hidden_size * 4                    # b1
        + 2 * hidden_size * code_size * 4        # w2
        + 2 * code_size * 4                      # b2
        + 2 * code_size * input_size * 2         # w3 (bf16)
        + 2 * input_size * 4                     # b3
        + 2 * input_size * 4                     # output
        + hidden_size * 4                        # h1 accumulator scratch
    )
    assert vmem_bytes < 24 * 1024 * 1024, (
        "resident layer-3 blocks too large for VMEM; tile layer-3's N"
    )

    flops = 2 * (input_size * hidden_size
                 + hidden_size * code_size
                 + code_size * input_size)
    bytes_accessed = (
        4 * input_size                              # x
        + 2 * input_size * hidden_size              # w1 (bf16)
        + 4 * hidden_size                           # b1
        + 4 * hidden_size * code_size               # w2
        + 4 * code_size                             # b2
        + 2 * code_size * input_size                # w3 (bf16)
        + 4 * input_size                            # b3
        + 4 * input_size                            # output
    )

    out = pl.pallas_call(
        _ae_kernel,
        out_shape=jax.ShapeDtypeStruct((1, input_size), jnp.float32),
        grid_spec=pltpu.PrefetchScalarGridSpec(
            num_scalar_prefetch=0,
            grid=(kt,),
            in_specs=[
                # x: resident full row; sliced in-kernel per K step.
                pl.BlockSpec((1, input_size), lambda k: (0, 0)),
                # w1: the single streamed operand (pipelines with compute).
                pl.BlockSpec((tk, hidden_size), lambda k: (k, 0)),
                # Resident small operands.
                pl.BlockSpec((1, hidden_size), lambda k: (0, 0)),
                pl.BlockSpec((hidden_size, code_size), lambda k: (0, 0)),
                pl.BlockSpec((1, code_size), lambda k: (0, 0)),
                pl.BlockSpec((code_size, input_size), lambda k: (0, 0)),
                pl.BlockSpec((1, input_size), lambda k: (0, 0)),
            ],
            out_specs=pl.BlockSpec((1, input_size), lambda k: (0, 0)),
            scratch_shapes=[pltpu.VMEM((1, hidden_size), jnp.float32)],
        ),
        compiler_params=pltpu.CompilerParams(
            dimension_semantics=("arbitrary",),
        ),
        cost_estimate=pl.CostEstimate(
            flops=flops, transcendentals=0, bytes_accessed=bytes_accessed
        ),
    )(x_row, w1c, b1r, w2, b2r, w3c, b3r)

    return out[0]  # (input_size,)


def init_params(key, input_size, hidden_size, code_size):
    """Deterministic PyTorch-Linear-like init.  Weights stored as (in, out)."""
    ks = jax.random.split(key, 6)

    def linear(kw, kb, fan_in, fan_out):
        bound = 1.0 / jnp.sqrt(fan_in)
        w = jax.random.uniform(kw, (fan_in, fan_out), jnp.float32, -bound, bound)
        b = jax.random.uniform(kb, (fan_out,), jnp.float32, -bound, bound)
        return w, b

    w1, b1 = linear(ks[0], ks[1], input_size, hidden_size)
    w2, b2 = linear(ks[2], ks[3], hidden_size, code_size)
    w3, b3 = linear(ks[4], ks[5], code_size, input_size)
    return (w1, b1, w2, b2, w3, b3)


def _reference(x, params):
    """Pure-f32 reference (exact module semantics)."""
    w1, b1, w2, b2, w3, b3 = params
    v = x.reshape(-1).astype(jnp.float32)
    h1 = jnp.maximum(v @ w1 + b1, 0.0)
    h2 = jnp.maximum(h1 @ w2 + b2, 0.0)
    return h2 @ w3 + b3


def _reference_quantized(x, params):
    """Reference using the same bf16-quantized w1/w3 the kernel consumes."""
    w1, b1, w2, b2, w3, b3 = params
    w1q = w1.astype(jnp.bfloat16).astype(jnp.float32)
    w3q = w3.astype(jnp.bfloat16).astype(jnp.float32)
    v = x.reshape(-1).astype(jnp.float32)
    h1 = jnp.maximum(v @ w1q + b1, 0.0)
    h2 = jnp.maximum(h1 @ w2 + b2, 0.0)
    return h2 @ w3q + b3


if __name__ == "__main__":
    key = jax.random.PRNGKey(0)
    k_x, k_p = jax.random.split(key)

    # Small NCHW-ish input; forward flattens it, so input_size = 2*4*16*16 = 2048.
    x = jax.random.normal(k_x, (2, 4, 16, 16), jnp.float32)
    input_size, hidden_size, code_size = 2048, 256, 64

    params = init_params(k_p, input_size, hidden_size, code_size)

    y = multilayer_autoencoder(x, params)
    y = jax.block_until_ready(y)
    assert y.shape == (input_size,)

    # Tight check: kernel vs. an XLA reference using identical bf16 weights
    # (isolates Pallas correctness from the intentional quantization).
    y_q = _reference_quantized(x, params)
    assert jnp.allclose(y, y_q, atol=1e-4, rtol=1e-4), "mismatch vs bf16-weight reference"

    # Relaxed check: kernel vs. the exact f32 module (bf16 weight quantization
    # only; tolerance relaxed per perf review).
    y_ref = _reference(x, params)
    assert jnp.allclose(y, y_ref, atol=2e-2, rtol=2e-2), "mismatch vs f32 reference"

    print("KERNEL_OK")
</pallas_src>

<mosaic_0001>
module attributes {stable_mosaic.version = 11 : i64} {
  func.func @_ae_kernel(%arg0: i32, %arg1: memref<1x2048xf32, #tpu.memory_space<vmem>>, %arg2: memref<1024x256xbf16, #tpu.memory_space<vmem>>, %arg3: memref<1x256xf32, #tpu.memory_space<vmem>>, %arg4: memref<256x64xf32, #tpu.memory_space<vmem>>, %arg5: memref<1x64xf32, #tpu.memory_space<vmem>>, %arg6: memref<64x2048xbf16, #tpu.memory_space<vmem>>, %arg7: memref<1x2048xf32, #tpu.memory_space<vmem>>, %arg8: memref<1x2048xf32, #tpu.memory_space<vmem>>, %arg9: memref<1x256xf32, #tpu.memory_space<vmem>>) attributes {dimension_semantics = [#tpu.dimension_semantics<arbitrary>], iteration_bounds = array<i64: 2>, scalar_prefetch = 0 : i64, scratch_operands = 1 : i64, tpu.core_type = #tpu.core_type<tc>, window_params = [{pipeline_mode = #tpu.pipeline_mode<synchronous>, transform_indices = @transform_0, window_bounds = array<i64: 1, 2048>}, {transform_indices = @transform_1, window_bounds = array<i64: 1024, 256>}, {pipeline_mode = #tpu.pipeline_mode<synchronous>, transform_indices = @transform_2, window_bounds = array<i64: 1, 256>}, {pipeline_mode = #tpu.pipeline_mode<synchronous>, transform_indices = @transform_3, window_bounds = array<i64: 256, 64>}, {pipeline_mode = #tpu.pipeline_mode<synchronous>, transform_indices = @transform_4, window_bounds = array<i64: 1, 64>}, {pipeline_mode = #tpu.pipeline_mode<synchronous>, transform_indices = @transform_5, window_bounds = array<i64: 64, 2048>}, {pipeline_mode = #tpu.pipeline_mode<synchronous>, transform_indices = @transform_6, window_bounds = array<i64: 1, 2048>}, {pipeline_mode = #tpu.pipeline_mode<synchronous>, transform_indices = @transform_7, window_bounds = array<i64: 1, 2048>}]} {
    %c0_i32 = arith.constant 0 : i32
    %0 = arith.cmpi eq, %arg0, %c0_i32 : i32
    %1 = arith.extui %0 : i1 to i32
    %c0_i32_0 = arith.constant 0 : i32
    %2 = arith.cmpi ne, %1, %c0_i32_0 : i32
    scf.if %2 {
      %cst_8 = arith.constant 0.000000e+00 : f32
      %16 = vector.broadcast %cst_8 : f32 to vector<1x256xf32>
      %c0_9 = arith.constant 0 : index
      %c0_10 = arith.constant 0 : index
      %17 = vector.load %arg9[%c0_9, %c0_10] : memref<1x256xf32, #tpu.memory_space<vmem>>, vector<1x256xf32>
      tpu.vector_store %arg9[%c0_9, %c0_10], %16 {strides = array<i32>} : memref<1x256xf32, #tpu.memory_space<vmem>>, vector<1x256xf32>,
    } else {
    }
    %c1024_i32 = arith.constant 1024 : i32
    %3 = arith.muli %arg0, %c1024_i32 : i32
    %4 = tpu.assume_multiple %3, 128 : i32
    %c0 = arith.constant 0 : index
    %5 = arith.index_cast %4 : i32 to index
    %6 = vector.load %arg1[%c0, %5] : memref<1x2048xf32, #tpu.memory_space<vmem>>, vector<1x1024xf32>
    %c0_1 = arith.constant 0 : index
    %c0_2 = arith.constant 0 : index
    %7 = vector.load %arg9[%c0_1, %c0_2] : memref<1x256xf32, #tpu.memory_space<vmem>>, vector<1x256xf32>
    %c0_3 = arith.constant 0 : index
    %c0_4 = arith.constant 0 : index
    %8 = vector.load %arg2[%c0_3, %c0_4] : memref<1024x256xbf16, #tpu.memory_space<vmem>>, vector<1024x256xbf16>
    %9 = arith.extf %8 : vector<1024x256xbf16> to vector<1024x256xf32>
    %cst = arith.constant dense<0.000000e+00> : vector<1x256xf32>
    %10 = tpu.matmul %6, %9, %cst {dimension_numbers = #tpu.dot_dimension_numbers<[1], [0], [0], [1], [0, 0, 1, 1], [], []>} : vector<1x1024xf32>, vector<1024x256xf32>, vector<1x256xf32> -> vector<1x256xf32>
    %11 = arith.addf %7, %10 : vector<1x256xf32>
    %c0_5 = arith.constant 0 : index
    %c0_6 = arith.constant 0 : index
    %12 = vector.load %arg9[%c0_5, %c0_6] : memref<1x256xf32, #tpu.memory_space<vmem>>, vector<1x256xf32>
    tpu.vector_store %arg9[%c0_5, %c0_6], %11 {strides = array<i32>} : memref<1x256xf32, #tpu.memory_space<vmem>>, vector<1x256xf32>,
    %c1_i32 = arith.constant 1 : i32
    %13 = arith.cmpi eq, %arg0, %c1_i32 : i32
    %14 = arith.extui %13 : i1 to i32
    %c0_i32_7 = arith.constant 0 : i32
    %15 = arith.cmpi ne, %14, %c0_i32_7 : i32
    scf.if %15 {
      %c0_8 = arith.constant 0 : index
      %c0_9 = arith.constant 0 : index
      %16 = vector.load %arg9[%c0_8, %c0_9] : memref<1x256xf32, #tpu.memory_space<vmem>>, vector<1x256xf32>
      %c0_10 = arith.constant 0 : index
      %c0_11 = arith.constant 0 : index
      %17 = vector.load %arg3[%c0_10, %c0_11] : memref<1x256xf32, #tpu.memory_space<vmem>>, vector<1x256xf32>
      %18 = arith.addf %16, %17 : vector<1x256xf32>
      %cst_12 = arith.constant 0.000000e+00 : f32
      %19 = vector.broadcast %cst_12 : f32 to vector<1x256xf32>
      %20 = arith.maximumf %18, %19 : vector<1x256xf32>
      %c0_13 = arith.constant 0 : index
      %c0_14 = arith.constant 0 : index
      %21 = vector.load %arg4[%c0_13, %c0_14] : memref<256x64xf32, #tpu.memory_space<vmem>>, vector<256x64xf32>
      %cst_15 = arith.constant dense<0.000000e+00> : vector<1x64xf32>
      %22 = tpu.matmul %20, %21, %cst_15 {dimension_numbers = #tpu.dot_dimension_numbers<[1], [0], [0], [1], [0, 0, 1, 1], [], []>} : vector<1x256xf32>, vector<256x64xf32>, vector<1x64xf32> -> vector<1x64xf32>
      %c0_16 = arith.constant 0 : index
      %c0_17 = arith.constant 0 : index
      %23 = vector.load %arg5[%c0_16, %c0_17] : memref<1x64xf32, #tpu.memory_space<vmem>>, vector<1x64xf32>
      %24 = arith.addf %22, %23 : vector<1x64xf32>
      %cst_18 = arith.constant 0.000000e+00 : f32
      %25 = vector.broadcast %cst_18 : f32 to vector<1x64xf32>
      %26 = arith.maximumf %24, %25 : vector<1x64xf32>
      %c0_19 = arith.constant 0 : index
      %c0_20 = arith.constant 0 : index
      %27 = vector.load %arg6[%c0_19, %c0_20] : memref<64x2048xbf16, #tpu.memory_space<vmem>>, vector<64x2048xbf16>
      %28 = arith.extf %27 : vector<64x2048xbf16> to vector<64x2048xf32>
      %cst_21 = arith.constant dense<0.000000e+00> : vector<1x2048xf32>
      %29 = tpu.matmul %26, %28, %cst_21 {dimension_numbers = #tpu.dot_dimension_numbers<[1], [0], [0], [1], [0, 0, 1, 1], [], []>} : vector<1x64xf32>, vector<64x2048xf32>, vector<1x2048xf32> -> vector<1x2048xf32>
      %c0_22 = arith.constant 0 : index
      %c0_23 = arith.constant 0 : index
      %30 = vector.load %arg7[%c0_22, %c0_23] : memref<1x2048xf32, #tpu.memory_space<vmem>>, vector<1x2048xf32>
      %31 = arith.addf %29, %30 : vector<1x2048xf32>
      %c0_24 = arith.constant 0 : index
      %c0_25 = arith.constant 0 : index
      %32 = vector.load %arg8[%c0_24, %c0_25] : memref<1x2048xf32, #tpu.memory_space<vmem>>, vector<1x2048xf32>
      tpu.vector_store %arg8[%c0_24, %c0_25], %31 {strides = array<i32>} : memref<1x2048xf32, #tpu.memory_space<vmem>>, vector<1x2048xf32>,
    } else {
    }
    return
  }
  func.func @transform_0(%arg0: i32) -> (i32, i32) {
    %c0_i32 = arith.constant 0 : i32
    %c0_i32_0 = arith.constant 0 : i32
    %c0_i32_1 = arith.constant 0 : i32
    return %c0_i32, %c0_i32_0 : i32, i32
  }
  func.func @transform_1(%arg0: i32) -> (i32, i32) {
    %c0_i32 = arith.constant 0 : i32
    %c0_i32_0 = arith.constant 0 : i32
    return %arg0, %c0_i32 : i32, i32
  }
  func.func @transform_2(%arg0: i32) -> (i32, i32) {
    %c0_i32 = arith.constant 0 : i32
    %c0_i32_0 = arith.constant 0 : i32
    %c0_i32_1 = arith.constant 0 : i32
    return %c0_i32, %c0_i32_0 : i32, i32
  }
  func.func @transform_3(%arg0: i32) -> (i32, i32) {
    %c0_i32 = arith.constant 0 : i32
    %c0_i32_0 = arith.constant 0 : i32
    %c0_i32_1 = arith.constant 0 : i32
    return %c0_i32, %c0_i32_0 : i32, i32
  }
  func.func @transform_4(%arg0: i32) -> (i32, i32) {
    %c0_i32 = arith.constant 0 : i32
    %c0_i32_0 = arith.constant 0 : i32
    %c0_i32_1 = arith.constant 0 : i32
    return %c0_i32, %c0_i32_0 : i32, i32
  }
  func.func @transform_5(%arg0: i32) -> (i32, i32) {
    %c0_i32 = arith.constant 0 : i32
    %c0_i32_0 = arith.constant 0 : i32
    %c0_i32_1 = arith.constant 0 : i32
    return %c0_i32, %c0_i32_0 : i32, i32
  }
  func.func @transform_6(%arg0: i32) -> (i32, i32) {
    %c0_i32 = arith.constant 0 : i32
    %c0_i32_0 = arith.constant 0 : i32
    %c0_i32_1 = arith.constant 0 : i32
    return %c0_i32, %c0_i32_0 : i32, i32
  }
  func.func @transform_7(%arg0: i32) -> (i32, i32) {
    %c0_i32 = arith.constant 0 : i32
    %c0_i32_0 = arith.constant 0 : i32
    %c0_i32_1 = arith.constant 0 : i32
    return %c0_i32, %c0_i32_0 : i32, i32
  }
}

</mosaic_0001>

<llo_original>
// kernel: tpu_custom_call.1
$region0: #{tpu_custom_call.1}
  #allocation0 [shape = 'u32[]', space=smem, size = 0x4, offset = 0x4, fixed_abs, tag = 'smem constant byte address 0x4 - core index']
  #allocation1 [shape = 'u32[144,128]{1,0:T(1,128)}', space=vmem, size = 0x12000, scoped, tag = 'internal scratch']
  #allocation2 [shape = 'f32[1,256]{1,0:T(1,128)}', space=vmem, size = 0x400, scoped, tag = 'scratch operand']
  %s0 = inlined_call_operand.vmem [shape: f32[1,2048], index: 0, kind: input, shape index: {}]
  %s1 = inlined_call_operand.hbm [shape: bf16[2048,256], index: 1, kind: input, shape index: {}]
  %s2 = inlined_call_operand.vmem [shape: f32[1,256], index: 2, kind: input, shape index: {}]
  %s3 = inlined_call_operand.vmem [shape: f32[256,64], index: 3, kind: input, shape index: {}]
  %s4 = inlined_call_operand.vmem [shape: f32[1,64], index: 4, kind: input, shape index: {}]
  %s5 = inlined_call_operand.hbm [shape: bf16[64,2048], index: 5, kind: input, shape index: {}]
  %s6 = inlined_call_operand.vmem [shape: f32[1,2048], index: 6, kind: input, shape index: {}]
  %s7 = inlined_call_operand.hbm [shape: f32[1,2048], index: 7, kind: output, shape index: {}]
  %s8 = sld [smem:[#allocation0]]
  $region77: #{tpu_custom_call.1} parent=0
    _
  %s10 = ssub.s32 1, %s8
  %s11 = scalar_select 0, %s10, %s8
  $region1: #{tpu_custom_call.1} parent=0
    #allocation3 [shape = 'u8[1048576]{0}', space=vmem, size = 0x100000, scoped, tag = 'input window, operand 1']
    #allocation4 [shape = 's32[2]{0}', space=sflag, size = 0x8, scoped, tag = 'scoped memory for tpu_custom_call.1']
    #allocation5 [shape = 's32[2]{0}', space=sflag, size = 0x8, scoped, tag = 'scoped memory for tpu_custom_call.1']
    #allocation6 [shape = 'u8[262144]{0}', space=vmem, size = 0x40000, scoped, tag = 'input window, operand 5, single buffered']
    #allocation7 [shape = 's32[1]{0}', space=sflag, size = 0x4, scoped, tag = 'scoped memory for tpu_custom_call.1']
    #allocation8 [shape = 'u8[8192]{0}', space=vmem, size = 0x2000, scoped, tag = 'output window, operand 0, single buffered']
    %12 = vsyncpa [#allocation4], 0
    %s13 = scalar_lea.sflag [#allocation4], 1
    %14 = vsyncpa %s13, 0
    %15 = vsyncpa [#allocation7], 0
    %16 = vsyncpa [#allocation5], 0
    loop: start=0, step=1, limit=4
    $region2: #{tpu_custom_call.1} parent=1 // loop_pre_header
      _
    $region3: #{tpu_custom_call.1} parent=1 // loop_header
      %s18 = sphi 0, %s22
      %p19 = scmp.ge.s32.totalorder %s18, 4
      %s26 = sphi 0, %s26
      %s28 = sphi 0, %s26
      %s29 = sphi 0, %s28
      %s43 = sphi 0, %s29
      %s49 = sphi 0, %s51
      %s52 = sphi 0, %s49
      %s53 = sphi 0, %s52
      %s69 = sphi 0, %s53
      %s73 = sphi 0, %s73
      %s75 = sphi 0, %s73
      %s76 = sphi 0, %s75
      %s90 = sphi 0, %s76
      %s94 = sphi 0, %s94
      %s96 = sphi 0, %s94
      %s97 = sphi 0, %s96
      %s111 = sphi 0, %s97
      %s115 = sphi 0, %s115
      %s117 = sphi 0, %s115
      %s118 = sphi 0, %s117
      %s132 = sphi 0, %s118
      %s136 = sphi 0, %s136
      %s138 = sphi 0, %s136
      %s139 = sphi 0, %s138
      %s153 = sphi 0, %s139
      %s157 = sphi 0, %s157
      %s159 = sphi 0, %s157
      %s160 = sphi 0, %s159
      %s174 = sphi 0, %s160
      %s178 = sphi 0, %s178
      %s180 = sphi 0, %s178
      %s181 = sphi 0, %s180
      %s195 = sphi 0, %s181
    $region4: #{tpu_custom_call.1} parent=1 // loop_header_branch
      %21 = sbr.rel (%p19) target = $region8
    $region5: #{tpu_custom_call.1} parent=1 // loop_body
      %s23 = ssub.s32 %s18, 1
      %s24 = ssub.s32 %s18, 2
      %s25 = sadd.s32 %s18, 1
      %s27 = sadd.s32 %s26, 1
      %p30 = scmp.eq.s32.totalorder %s18, 1
      %p31 = scmp.ne.s32.totalorder %s26, %s28
      %p32 = scmp.eq.s32.totalorder %s18, 0
      %p33 = por %p31, %p32
      %p34 = scmp.ne.s32.totalorder %s26, %s28
      %p35 = scmp.eq.s32.totalorder %s23, 1
      %p36 = por %p34, %p35
      %p37 = scmp.ne.s32.totalorder %s28, %s29
      %p38 = scmp.eq.s32.totalorder %s23, 0
      %p39 = por %p37, %p38
      %p40 = scmp.ne.s32.totalorder %s28, %s29
      %p41 = scmp.eq.s32.totalorder %s24, 1
      %p42 = por %p40, %p41
      %p44 = scmp.ne.s32.totalorder %s29, %s43
      %p45 = scmp.eq.s32.totalorder %s24, 0
      %p46 = por %p44, %p45
      %s47 = ssub.s32 %s18, %s25
      %p48 = scmp.eq.s32.totalorder %s47, 0
      %s50 = sadd.s32 %s49, 1
      %s51 = scalar_select %p48, %s49, %s50
      %p54 = pneg %p48
      %p55 = scmp.eq.s32.totalorder %s18, 1
      %p56 = por %p54, %p55
      %p57 = scmp.ne.s32.totalorder %s49, %s52
      %p58 = scmp.eq.s32.totalorder %s18, 0
      %p59 = por %p57, %p58
      %p60 = scmp.ne.s32.totalorder %s49, %s52
      %p61 = scmp.eq.s32.totalorder %s23, 1
      %p62 = por %p60, %p61
      %p63 = scmp.ne.s32.totalorder %s52, %s53
      %p64 = scmp.eq.s32.totalorder %s23, 0
      %p65 = por %p63, %p64
      %p66 = scmp.ne.s32.totalorder %s52, %s53
      %p67 = scmp.eq.s32.totalorder %s24, 1
      %p68 = por %p66, %p67
      %p70 = scmp.ne.s32.totalorder %s53, %s69
      %p71 = scmp.eq.s32.totalorder %s24, 0
      %p72 = por %p70, %p71
      %s74 = sadd.s32 %s73, 1
      %p77 = scmp.eq.s32.totalorder %s18, 1
      %p78 = scmp.ne.s32.totalorder %s73, %s75
      %p79 = scmp.eq.s32.totalorder %s18, 0
      %p80 = por %p78, %p79
      %p81 = scmp.ne.s32.totalorder %s73, %s75
      %p82 = scmp.eq.s32.totalorder %s23, 1
      %p83 = por %p81, %p82
      %p84 = scmp.ne.s32.totalorder %s75, %s76
      %p85 = scmp.eq.s32.totalorder %s23, 0
      %p86 = por %p84, %p85
      %p87 = scmp.ne.s32.totalorder %s75, %s76
      %p88 = scmp.eq.s32.totalorder %s24, 1
      %p89 = por %p87, %p88
      %p91 = scmp.ne.s32.totalorder %s76, %s90
      %p92 = scmp.eq.s32.totalorder %s24, 0
      %p93 = por %p91, %p92
      %s95 = sadd.s32 %s94, 1
      %p98 = scmp.eq.s32.totalorder %s18, 1
      %p99 = scmp.ne.s32.totalorder %s94, %s96
      %p100 = scmp.eq.s32.totalorder %s18, 0
      %p101 = por %p99, %p100
      %p102 = scmp.ne.s32.totalorder %s94, %s96
      %p103 = scmp.eq.s32.totalorder %s23, 1
      %p104 = por %p102, %p103
      %p105 = scmp.ne.s32.totalorder %s96, %s97
      %p106 = scmp.eq.s32.totalorder %s23, 0
      %p107 = por %p105, %p106
      %p108 = scmp.ne.s32.totalorder %s96, %s97
      %p109 = scmp.eq.s32.totalorder %s24, 1
      %p110 = por %p108, %p109
      %p112 = scmp.ne.s32.totalorder %s97, %s111
      %p113 = scmp.eq.s32.totalorder %s24, 0
      %p114 = por %p112, %p113
      %s116 = sadd.s32 %s115, 1
      %p119 = scmp.eq.s32.totalorder %s18, 1
      %p120 = scmp.ne.s32.totalorder %s115, %s117
      %p121 = scmp.eq.s32.totalorder %s18, 0
      %p122 = por %p120, %p121
      %p123 = scmp.ne.s32.totalorder %s115, %s117
      %p124 = scmp.eq.s32.totalorder %s23, 1
      %p125 = por %p123, %p124
      %p126 = scmp.ne.s32.totalorder %s117, %s118
      %p127 = scmp.eq.s32.totalorder %s23, 0
      %p128 = por %p126, %p127
      %p129 = scmp.ne.s32.totalorder %s117, %s118
      %p130 = scmp.eq.s32.totalorder %s24, 1
      %p131 = por %p129, %p130
      %p133 = scmp.ne.s32.totalorder %s118, %s132
      %p134 = scmp.eq.s32.totalorder %s24, 0
      %p135 = por %p133, %p134
      %s137 = sadd.s32 %s136, 1
      %p140 = scmp.eq.s32.totalorder %s18, 1
      %p141 = scmp.ne.s32.totalorder %s136, %s138
      %p142 = scmp.eq.s32.totalorder %s18, 0
      %p143 = por %p141, %p142
      %p144 = scmp.ne.s32.totalorder %s136, %s138
      %p145 = scmp.eq.s32.totalorder %s23, 1
      %p146 = por %p144, %p145
      %p147 = scmp.ne.s32.totalorder %s138, %s139
      %p148 = scmp.eq.s32.totalorder %s23, 0
      %p149 = por %p147, %p148
      %p150 = scmp.ne.s32.totalorder %s138, %s139
      %p151 = scmp.eq.s32.totalorder %s24, 1
      %p152 = por %p150, %p151
      %p154 = scmp.ne.s32.totalorder %s139, %s153
      %p155 = scmp.eq.s32.totalorder %s24, 0
      %p156 = por %p154, %p155
      %s158 = sadd.s32 %s157, 1
      %p161 = scmp.eq.s32.totalorder %s18, 1
      %p162 = scmp.ne.s32.totalorder %s157, %s159
      %p163 = scmp.eq.s32.totalorder %s18, 0
      %p164 = por %p162, %p163
      %p165 = scmp.ne.s32.totalorder %s157, %s159
      %p166 = scmp.eq.s32.totalorder %s23, 1
      %p167 = por %p165, %p166
      %p168 = scmp.ne.s32.totalorder %s159, %s160
      %p169 = scmp.eq.s32.totalorder %s23, 0
      %p170 = por %p168, %p169
      %p171 = scmp.ne.s32.totalorder %s159, %s160
      %p172 = scmp.eq.s32.totalorder %s24, 1
      %p173 = por %p171, %p172
      %p175 = scmp.ne.s32.totalorder %s160, %s174
      %p176 = scmp.eq.s32.totalorder %s24, 0
      %p177 = por %p175, %p176
      %s179 = sadd.s32 %s178, 1
      %p182 = scmp.eq.s32.totalorder %s18, 1
      %p183 = scmp.ne.s32.totalorder %s178, %s180
      %p184 = scmp.eq.s32.totalorder %s18, 0
      %p185 = por %p183, %p184
      %p186 = scmp.ne.s32.totalorder %s178, %s180
      %p187 = scmp.eq.s32.totalorder %s23, 1
      %p188 = por %p186, %p187
      %p189 = scmp.ne.s32.totalorder %s180, %s181
      %p190 = scmp.eq.s32.totalorder %s23, 0
      %p191 = por %p189, %p190
      %p192 = scmp.ne.s32.totalorder %s180, %s181
      %p193 = scmp.eq.s32.totalorder %s24, 1
      %p194 = por %p192, %p193
      %p196 = scmp.ne.s32.totalorder %s181, %s195
      %p197 = scmp.eq.s32.totalorder %s24, 0
      %p198 = por %p196, %p197
      %p199 = scmp.le.s32.totalorder 1, %s18
      %p200 = scmp.lt.s32.totalorder %s18, 3
      %p201 = pnand %p199, %p200
      %p202 = pneg %p201
      // Predicated region
      $region9: #{tpu_custom_call.1} parent=5 // pred_check
        _
      $region10: #{tpu_custom_call.1} parent=5 // pred_check_branch
        %204 = sbr.rel (%p201) target = $region12
      $region11: #{tpu_custom_call.1} parent=5 // pred_region
        %s205 = ssub.s32 %s18, 1
        // Predicated region
        $region13: #{tpu_custom_call.1} parent=11 // pred_check
          %p206 = pneg %p39
        $region14: #{tpu_custom_call.1} parent=11 // pred_check_branch
          %208 = sbr.rel (%p206) target = $region16
        $region15: #{tpu_custom_call.1} parent=11 // pred_region
          _
        $region16: #{tpu_custom_call.1} parent=11 // pred_fallthru
          _
        // Predicated region
        $region17: #{tpu_custom_call.1} parent=11 // pred_check
          %p209 = pneg %p86
        $region18: #{tpu_custom_call.1} parent=11 // pred_check_branch
          %211 = sbr.rel (%p209) target = $region20
        $region19: #{tpu_custom_call.1} parent=11 // pred_region
          _
        $region20: #{tpu_custom_call.1} parent=11 // pred_fallthru
          _
        // Predicated region
        $region21: #{tpu_custom_call.1} parent=11 // pred_check
          %p212 = pneg %p107
        $region22: #{tpu_custom_call.1} parent=11 // pred_check_branch
          %214 = sbr.rel (%p212) target = $region24
        $region23: #{tpu_custom_call.1} parent=11 // pred_region
          _
        $region24: #{tpu_custom_call.1} parent=11 // pred_fallthru
          _
        // Predicated region
        $region25: #{tpu_custom_call.1} parent=11 // pred_check
          %p215 = pneg %p128
        $region26: #{tpu_custom_call.1} parent=11 // pred_check_branch
          %217 = sbr.rel (%p215) target = $region28
        $region27: #{tpu_custom_call.1} parent=11 // pred_region
          _
        $region28: #{tpu_custom_call.1} parent=11 // pred_fallthru
          _
        // Predicated region
        $region29: #{tpu_custom_call.1} parent=11 // pred_check
          %p218 = pneg %p149
        $region30: #{tpu_custom_call.1} parent=11 // pred_check_branch
          %220 = sbr.rel (%p218) target = $region32
        $region31: #{tpu_custom_call.1} parent=11 // pred_region
          %s222 = ssub.s32 8192, 8192
          %223 = vsyncadd [#allocation7], %s222
          %s224 = sshll.u32 [#allocation6], 4
          %s225 = int_to_ptr.vmem [resolvable:$true] %s224
          %230 = dma.hbm_to_vmem [thread:$0]  %s5, 8192, %s225, [#allocation7], 1024, 1024, 64
        $region32: #{tpu_custom_call.1} parent=11 // pred_fallthru
          _
        // Predicated region
        $region33: #{tpu_custom_call.1} parent=11 // pred_check
          %p231 = pneg %p170
        $region34: #{tpu_custom_call.1} parent=11 // pred_check_branch
          %233 = sbr.rel (%p231) target = $region36
        $region35: #{tpu_custom_call.1} parent=11 // pred_region
          _
        $region36: #{tpu_custom_call.1} parent=11 // pred_fallthru
          _
      $region12: #{tpu_custom_call.1} parent=5 // pred_fallthru
        _
      %p234 = scmp.lt.s32.totalorder %s18, 2
      // Predicated region
      $region37: #{tpu_custom_call.1} parent=5 // pred_check
        %p235 = pneg %p234
      $region38: #{tpu_custom_call.1} parent=5 // pred_check_branch
        %237 = sbr.rel (%p235) target = $region40
      $region39: #{tpu_custom_call.1} parent=5 // pred_region
        // Predicated region
        $region41: #{tpu_custom_call.1} parent=39 // pred_check
          %p238 = pneg %p59
        $region42: #{tpu_custom_call.1} parent=39 // pred_check_branch
          %240 = sbr.rel (%p238) target = $region44
        $region43: #{tpu_custom_call.1} parent=39 // pred_region
          %s241 = sand.u32 %s49, 1
          %s242 = scalar_lea.sflag [#allocation4], %s241
          %s243 = sand.u32 %s49, 1
          %s244 = smul.addr %s243, 1024
          %s245 = scalar_lea.vmem [#allocation3], %s244
          %s246 = smul.u32 128, %s18
          %s248 = ssub.s32 16384, 16384
          %249 = vsyncadd %s242, %s248
          %s250 = smul.addr %s246, 2
          %s251 = smul.addr %s250, 64
          %s252 = scalar_lea.hbm %s1, %s251
          %s253 = sshll.u32 %s245, 4
          %s254 = int_to_ptr.vmem [resolvable:$true] %s253
          %259 = dma.hbm_to_vmem [thread:$0]  %s252, 16384, %s254, %s242, 128, 128, 8
        $region44: #{tpu_custom_call.1} parent=39 // pred_fallthru
          _
      $region40: #{tpu_custom_call.1} parent=5 // pred_fallthru
        _
      %p260 = scmp.le.s32.totalorder 1, %s18
      %p261 = scmp.lt.s32.totalorder %s18, 3
      %p262 = pnand %p260, %p261
      %p263 = pneg %p262
      // Predicated region
      $region45: #{tpu_custom_call.1} parent=5 // pred_check
        _
      $region46: #{tpu_custom_call.1} parent=5 // pred_check_branch
        %265 = sbr.rel (%p262) target = $region48
      $region47: #{tpu_custom_call.1} parent=5 // pred_region
        %s266 = ssub.s32 %s18, 1
        %s267 = sand.u32 %s52, 1
        %s268 = scalar_lea.sflag [#allocation4], %s267
        %s269 = sand.u32 %s52, 1
        %s270 = smul.addr %s269, 1024
        %s271 = scalar_lea.vmem [#allocation3], %s270
        // Predicated region
        $region49: #{tpu_custom_call.1} parent=47 // pred_check
          %p272 = pneg %p65
        $region50: #{tpu_custom_call.1} parent=47 // pred_check_branch
          %274 = sbr.rel (%p272) target = $region52
        $region51: #{tpu_custom_call.1} parent=47 // pred_region
          %275 = dma.done %s268, 16384
        $region52: #{tpu_custom_call.1} parent=47 // pred_fallthru
          _
        // Predicated region
        $region53: #{tpu_custom_call.1} parent=47 // pred_check
          %p276 = pneg %p149
        $region54: #{tpu_custom_call.1} parent=47 // pred_check_branch
          %278 = sbr.rel (%p276) target = $region56
        $region55: #{tpu_custom_call.1} parent=47 // pred_region
          %279 = dma.done [#allocation7], 8192
        $region56: #{tpu_custom_call.1} parent=47 // pred_fallthru
          _
        %p280 = pneg %p39
        %p281 = pneg %p36
        %s282 = sand.u32 %s52, 1
        %s283 = scalar_lea.sflag [#allocation4], %s282
        %s284 = sand.u32 %s52, 1
        %s285 = smul.addr %s284, 1024
        %s286 = scalar_lea.vmem [#allocation3], %s285
        %p287 = pneg %p65
        %p288 = pneg %p62
        %p289 = pneg %p86
        %p290 = pneg %p83
        %p291 = pneg %p107
        %p292 = pneg %p104
        %p293 = pneg %p128
        %p294 = pneg %p125
        %p295 = pneg %p149
        %p296 = pneg %p146
        %p297 = pneg %p170
        %p298 = pneg %p167
        %p299 = pneg %p191
        %p300 = pneg %p188
        %s301 = smul.u32 128, %s23
        %p302 = scmp.eq.s32.totalorder %s23, 0
        // Predicated region
        $region57: #{tpu_custom_call.1} parent=47 // pred_check
          %p303 = pneg %p302
        $region58: #{tpu_custom_call.1} parent=47 // pred_check_branch
          %305 = sbr.rel (%p303) target = $region60
        $region59: #{tpu_custom_call.1} parent=47 // pred_region
          %v306 = vlaneseq
          %vm307 = vcmp.ge.s32.totalorder %v306, 0
          %vm308 = vcmp.lt.s32.totalorder %v306, 256
          %vm309 = vmand %vm307, %vm308
          %310 = vst.msk [vmem:[#allocation2] sm:$0x3] %vm309, 0.0
        $region60: #{tpu_custom_call.1} parent=47 // pred_fallthru
          _
        %s311 = smul.u32 %s23, 1024
        %s312 = sshra.s32 %s311, 7
        %s313 = sand.u32 %s311, 127
        %s314 = scalar_lea.vmem %s0, %s312
        %v315 = vld [vmem:[%s314] sm:$0xff]
        %v316 = vld [vmem:[#allocation2] sm:$0x3]
        %v317 = vld [vmem:[%s271] sm:$0xff]
        %v318 = vld [vmem:[%s271 + $0x8] sm:$0xff]
        %v319 = vld [vmem:[%s271 + $0x10] sm:$0xff]
        %v320 = vld [vmem:[%s271 + $0x18] sm:$0xff]
        %v321 = vld [vmem:[%s271 + $0x20] sm:$0xff]
        %v322 = vld [vmem:[%s271 + $0x28] sm:$0xff]
        %v323 = vld [vmem:[%s271 + $0x30] sm:$0xff]
        %v324 = vld [vmem:[%s271 + $0x38] sm:$0xff]
        %v325 = vld [vmem:[%s271 + $0x40] sm:$0xff]
        %v326 = vld [vmem:[%s271 + $0x48] sm:$0xff]
        %v327 = vld [vmem:[%s271 + $0x50] sm:$0xff]
        %v328 = vld [vmem:[%s271 + $0x58] sm:$0xff]
        %v329 = vld [vmem:[%s271 + $0x60] sm:$0xff]
        %v330 = vld [vmem:[%s271 + $0x68] sm:$0xff]
        %v331 = vld [vmem:[%s271 + $0x70] sm:$0xff]
        %v332 = vld [vmem:[%s271 + $0x78] sm:$0xff]
        %v333 = vld [vmem:[%s271 + $0x80] sm:$0xff]
        %v334 = vld [vmem:[%s271 + $0x88] sm:$0xff]
        %v335 = vld [vmem:[%s271 + $0x90] sm:$0xff]
        %v336 = vld [vmem:[%s271 + $0x98] sm:$0xff]
        %v337 = vld [vmem:[%s271 + $0xa0] sm:$0xff]
        %v338 = vld [vmem:[%s271 + $0xa8] sm:$0xff]
        %v339 = vld [vmem:[%s271 + $0xb0] sm:$0xff]
        %v340 = vld [vmem:[%s271 + $0xb8] sm:$0xff]
        %v341 = vld [vmem:[%s271 + $0xc0] sm:$0xff]
        %v342 = vld [vmem:[%s271 + $0xc8] sm:$0xff]
        %v343 = vld [vmem:[%s271 + $0xd0] sm:$0xff]
        %v344 = vld [vmem:[%s271 + $0xd8] sm:$0xff]
        %v345 = vld [vmem:[%s271 + $0xe0] sm:$0xff]
        %v346 = vld [vmem:[%s271 + $0xe8] sm:$0xff]
        %v347 = vld [vmem:[%s271 + $0xf0] sm:$0xff]
        %v348 = vld [vmem:[%s271 + $0xf8] sm:$0xff]
        %v349 = vld [vmem:[%s271 + $0x100] sm:$0xff]
        %v350 = vld [vmem:[%s271 + $0x108] sm:$0xff]
        %v351 = vld [vmem:[%s271 + $0x110] sm:$0xff]
        %v352 = vld [vmem:[%s271 + $0x118] sm:$0xff]
        %v353 = vld [vmem:[%s271 + $0x120] sm:$0xff]
        %v354 = vld [vmem:[%s271 + $0x128] sm:$0xff]
        %v355 = vld [vmem:[%s271 + $0x130] sm:$0xff]
        %v356 = vld [vmem:[%s271 + $0x138] sm:$0xff]
        %v357 = vld [vmem:[%s271 + $0x140] sm:$0xff]
        %v358 = vld [vmem:[%s271 + $0x148] sm:$0xff]
        %v359 = vld [vmem:[%s271 + $0x150] sm:$0xff]
        %v360 = vld [vmem:[%s271 + $0x158] sm:$0xff]
        %v361 = vld [vmem:[%s271 + $0x160] sm:$0xff]
        %v362 = vld [vmem:[%s271 + $0x168] sm:$0xff]
        %v363 = vld [vmem:[%s271 + $0x170] sm:$0xff]
        %v364 = vld [vmem:[%s271 + $0x178] sm:$0xff]
        %v365 = vld [vmem:[%s271 + $0x180] sm:$0xff]
        %v366 = vld [vmem:[%s271 + $0x188] sm:$0xff]
        %v367 = vld [vmem:[%s271 + $0x190] sm:$0xff]
        %v368 = vld [vmem:[%s271 + $0x198] sm:$0xff]
        %v369 = vld [vmem:[%s271 + $0x1a0] sm:$0xff]
        %v370 = vld [vmem:[%s271 + $0x1a8] sm:$0xff]
        %v371 = vld [vmem:[%s271 + $0x1b0] sm:$0xff]
        %v372 = vld [vmem:[%s271 + $0x1b8] sm:$0xff]
        %v373 = vld [vmem:[%s271 + $0x1c0] sm:$0xff]
        %v374 = vld [vmem:[%s271 + $0x1c8] sm:$0xff]
        %v375 = vld [vmem:[%s271 + $0x1d0] sm:$0xff]
        %v376 = vld [vmem:[%s271 + $0x1d8] sm:$0xff]
        %v377 = vld [vmem:[%s271 + $0x1e0] sm:$0xff]
        %v378 = vld [vmem:[%s271 + $0x1e8] sm:$0xff]
        %v379 = vld [vmem:[%s271 + $0x1f0] sm:$0xff]
        %v380 = vld [vmem:[%s271 + $0x1f8] sm:$0xff]
        %v381 = vld [vmem:[%s271 + $0x200] sm:$0xff]
        %v382 = vld [vmem:[%s271 + $0x208] sm:$0xff]
        %v383 = vld [vmem:[%s271 + $0x210] sm:$0xff]
        %v384 = vld [vmem:[%s271 + $0x218] sm:$0xff]
        %v385 = vld [vmem:[%s271 + $0x220] sm:$0xff]
        %v386 = vld [vmem:[%s271 + $0x228] sm:$0xff]
        %v387 = vld [vmem:[%s271 + $0x230] sm:$0xff]
        %v388 = vld [vmem:[%s271 + $0x238] sm:$0xff]
        %v389 = vld [vmem:[%s271 + $0x240] sm:$0xff]
        %v390 = vld [vmem:[%s271 + $0x248] sm:$0xff]
        %v391 = vld [vmem:[%s271 + $0x250] sm:$0xff]
        %v392 = vld [vmem:[%s271 + $0x258] sm:$0xff]
        %v393 = vld [vmem:[%s271 + $0x260] sm:$0xff]
        %v394 = vld [vmem:[%s271 + $0x268] sm:$0xff]
        %v395 = vld [vmem:[%s271 + $0x270] sm:$0xff]
        %v396 = vld [vmem:[%s271 + $0x278] sm:$0xff]
        %v397 = vld [vmem:[%s271 + $0x280] sm:$0xff]
        %v398 = vld [vmem:[%s271 + $0x288] sm:$0xff]
        %v399 = vld [vmem:[%s271 + $0x290] sm:$0xff]
        %v400 = vld [vmem:[%s271 + $0x298] sm:$0xff]
        %v401 = vld [vmem:[%s271 + $0x2a0] sm:$0xff]
        %v402 = vld [vmem:[%s271 + $0x2a8] sm:$0xff]
        %v403 = vld [vmem:[%s271 + $0x2b0] sm:$0xff]
        %v404 = vld [vmem:[%s271 + $0x2b8] sm:$0xff]
        %v405 = vld [vmem:[%s271 + $0x2c0] sm:$0xff]
        %v406 = vld [vmem:[%s271 + $0x2c8] sm:$0xff]
        %v407 = vld [vmem:[%s271 + $0x2d0] sm:$0xff]
        %v408 = vld [vmem:[%s271 + $0x2d8] sm:$0xff]
        %v409 = vld [vmem:[%s271 + $0x2e0] sm:$0xff]
        %v410 = vld [vmem:[%s271 + $0x2e8] sm:$0xff]
        %v411 = vld [vmem:[%s271 + $0x2f0] sm:$0xff]
        %v412 = vld [vmem:[%s271 + $0x2f8] sm:$0xff]
        %v413 = vld [vmem:[%s271 + $0x300] sm:$0xff]
        %v414 = vld [vmem:[%s271 + $0x308] sm:$0xff]
        %v415 = vld [vmem:[%s271 + $0x310] sm:$0xff]
        %v416 = vld [vmem:[%s271 + $0x318] sm:$0xff]
        %v417 = vld [vmem:[%s271 + $0x320] sm:$0xff]
        %v418 = vld [vmem:[%s271 + $0x328] sm:$0xff]
        %v419 = vld [vmem:[%s271 + $0x330] sm:$0xff]
        %v420 = vld [vmem:[%s271 + $0x338] sm:$0xff]
        %v421 = vld [vmem:[%s271 + $0x340] sm:$0xff]
        %v422 = vld [vmem:[%s271 + $0x348] sm:$0xff]
        %v423 = vld [vmem:[%s271 + $0x350] sm:$0xff]
        %v424 = vld [vmem:[%s271 + $0x358] sm:$0xff]
        %v425 = vld [vmem:[%s271 + $0x360] sm:$0xff]
        %v426 = vld [vmem:[%s271 + $0x368] sm:$0xff]
        %v427 = vld [vmem:[%s271 + $0x370] sm:$0xff]
        %v428 = vld [vmem:[%s271 + $0x378] sm:$0xff]
        %v429 = vld [vmem:[%s271 + $0x380] sm:$0xff]
        %v430 = vld [vmem:[%s271 + $0x388] sm:$0xff]
        %v431 = vld [vmem:[%s271 + $0x390] sm:$0xff]
        %v432 = vld [vmem:[%s271 + $0x398] sm:$0xff]
        %v433 = vld [vmem:[%s271 + $0x3a0] sm:$0xff]
        %v434 = vld [vmem:[%s271 + $0x3a8] sm:$0xff]
        %v435 = vld [vmem:[%s271 + $0x3b0] sm:$0xff]
        %v436 = vld [vmem:[%s271 + $0x3b8] sm:$0xff]
        %v437 = vld [vmem:[%s271 + $0x3c0] sm:$0xff]
        %v438 = vld [vmem:[%s271 + $0x3c8] sm:$0xff]
        %v439 = vld [vmem:[%s271 + $0x3d0] sm:$0xff]
        %v440 = vld [vmem:[%s271 + $0x3d8] sm:$0xff]
        %v441 = vld [vmem:[%s271 + $0x3e0] sm:$0xff]
        %v442 = vld [vmem:[%s271 + $0x3e8] sm:$0xff]
        %v443 = vld [vmem:[%s271 + $0x3f0] sm:$0xff]
        %v444 = vld [vmem:[%s271 + $0x3f8] sm:$0xff]
        %v445 = vunpack.c.l.bf16 %v317
        %v446 = vunpack.c.h.bf16 %v317
        %v447 = vunpack.c.l.bf16 %v318
        %v448 = vunpack.c.h.bf16 %v318
        %v449 = vunpack.c.l.bf16 %v319
        %v450 = vunpack.c.h.bf16 %v319
        %v451 = vunpack.c.l.bf16 %v320
        %v452 = vunpack.c.h.bf16 %v320
        %v453 = vunpack.c.l.bf16 %v321
        %v454 = vunpack.c.h.bf16 %v321
        %v455 = vunpack.c.l.bf16 %v322
        %v456 = vunpack.c.h.bf16 %v322
        %v457 = vunpack.c.l.bf16 %v323
        %v458 = vunpack.c.h.bf16 %v323
        %v459 = vunpack.c.l.bf16 %v324
        %v460 = vunpack.c.h.bf16 %v324
        %v461 = vunpack.c.l.bf16 %v325
        %v462 = vunpack.c.h.bf16 %v325
        %v463 = vunpack.c.l.bf16 %v326
        %v464 = vunpack.c.h.bf16 %v326
        %v465 = vunpack.c.l.bf16 %v327
        %v466 = vunpack.c.h.bf16 %v327
        %v467 = vunpack.c.l.bf16 %v328
        %v468 = vunpack.c.h.bf16 %v328
        %v469 = vunpack.c.l.bf16 %v329
        %v470 = vunpack.c.h.bf16 %v329
        %v471 = vunpack.c.l.bf16 %v330
        %v472 = vunpack.c.h.bf16 %v330
        %v473 = vunpack.c.l.bf16 %v331
        %v474 = vunpack.c.h.bf16 %v331
        %v475 = vunpack.c.l.bf16 %v332
        %v476 = vunpack.c.h.bf16 %v332
        %v477 = vunpack.c.l.bf16 %v333
        %v478 = vunpack.c.h.bf16 %v333
        %v479 = vunpack.c.l.bf16 %v334
        %v480 = vunpack.c.h.bf16 %v334
        %v481 = vunpack.c.l.bf16 %v335
        %v482 = vunpack.c.h.bf16 %v335
        %v483 = vunpack.c.l.bf16 %v336
        %v484 = vunpack.c.h.bf16 %v336
        %v485 = vunpack.c.l.bf16 %v337
        %v486 = vunpack.c.h.bf16 %v337
        %v487 = vunpack.c.l.bf16 %v338
        %v488 = vunpack.c.h.bf16 %v338
        %v489 = vunpack.c.l.bf16 %v339
        %v490 = vunpack.c.h.bf16 %v339
        %v491 = vunpack.c.l.bf16 %v340
        %v492 = vunpack.c.h.bf16 %v340
        %v493 = vunpack.c.l.bf16 %v341
        %v494 = vunpack.c.h.bf16 %v341
        %v495 = vunpack.c.l.bf16 %v342
        %v496 = vunpack.c.h.bf16 %v342
        %v497 = vunpack.c.l.bf16 %v343
        %v498 = vunpack.c.h.bf16 %v343
        %v499 = vunpack.c.l.bf16 %v344
        %v500 = vunpack.c.h.bf16 %v344
        %v501 = vunpack.c.l.bf16 %v345
        %v502 = vunpack.c.h.bf16 %v345
        %v503 = vunpack.c.l.bf16 %v346
        %v504 = vunpack.c.h.bf16 %v346
        %v505 = vunpack.c.l.bf16 %v347
        %v506 = vunpack.c.h.bf16 %v347
        %v507 = vunpack.c.l.bf16 %v348
        %v508 = vunpack.c.h.bf16 %v348
        %v509 = vunpack.c.l.bf16 %v349
        %v510 = vunpack.c.h.bf16 %v349
        %v511 = vunpack.c.l.bf16 %v350
        %v512 = vunpack.c.h.bf16 %v350
        %v513 = vunpack.c.l.bf16 %v351
        %v514 = vunpack.c.h.bf16 %v351
        %v515 = vunpack.c.l.bf16 %v352
        %v516 = vunpack.c.h.bf16 %v352
        %v517 = vunpack.c.l.bf16 %v353
        %v518 = vunpack.c.h.bf16 %v353
        %v519 = vunpack.c.l.bf16 %v354
        %v520 = vunpack.c.h.bf16 %v354
        %v521 = vunpack.c.l.bf16 %v355
        %v522 = vunpack.c.h.bf16 %v355
        %v523 = vunpack.c.l.bf16 %v356
        %v524 = vunpack.c.h.bf16 %v356
        %v525 = vunpack.c.l.bf16 %v357
        %v526 = vunpack.c.h.bf16 %v357
        %v527 = vunpack.c.l.bf16 %v358
        %v528 = vunpack.c.h.bf16 %v358
        %v529 = vunpack.c.l.bf16 %v359
        %v530 = vunpack.c.h.bf16 %v359
        %v531 = vunpack.c.l.bf16 %v360
        %v532 = vunpack.c.h.bf16 %v360
        %v533 = vunpack.c.l.bf16 %v361
        %v534 = vunpack.c.h.bf16 %v361
        %v535 = vunpack.c.l.bf16 %v362
        %v536 = vunpack.c.h.bf16 %v362
        %v537 = vunpack.c.l.bf16 %v363
        %v538 = vunpack.c.h.bf16 %v363
        %v539 = vunpack.c.l.bf16 %v364
        %v540 = vunpack.c.h.bf16 %v364
        %v541 = vunpack.c.l.bf16 %v365
        %v542 = vunpack.c.h.bf16 %v365
        %v543 = vunpack.c.l.bf16 %v366
        %v544 = vunpack.c.h.bf16 %v366
        %v545 = vunpack.c.l.bf16 %v367
        %v546 = vunpack.c.h.bf16 %v367
        %v547 = vunpack.c.l.bf16 %v368
        %v548 = vunpack.c.h.bf16 %v368
        %v549 = vunpack.c.l.bf16 %v369
        %v550 = vunpack.c.h.bf16 %v369
        %v551 = vunpack.c.l.bf16 %v370
        %v552 = vunpack.c.h.bf16 %v370
        %v553 = vunpack.c.l.bf16 %v371
        %v554 = vunpack.c.h.bf16 %v371
        %v555 = vunpack.c.l.bf16 %v372
        %v556 = vunpack.c.h.bf16 %v372
        %v557 = vunpack.c.l.bf16 %v373
        %v558 = vunpack.c.h.bf16 %v373
        %v559 = vunpack.c.l.bf16 %v374
        %v560 = vunpack.c.h.bf16 %v374
        %v561 = vunpack.c.l.bf16 %v375
        %v562 = vunpack.c.h.bf16 %v375
        %v563 = vunpack.c.l.bf16 %v376
        %v564 = vunpack.c.h.bf16 %v376
        %v565 = vunpack.c.l.bf16 %v377
        %v566 = vunpack.c.h.bf16 %v377
        %v567 = vunpack.c.l.bf16 %v378
        %v568 = vunpack.c.h.bf16 %v378
        %v569 = vunpack.c.l.bf16 %v379
        %v570 = vunpack.c.h.bf16 %v379
        %v571 = vunpack.c.l.bf16 %v380
        %v572 = vunpack.c.h.bf16 %v380
        %v573 = vunpack.c.l.bf16 %v381
        %v574 = vunpack.c.h.bf16 %v381
        %v575 = vunpack.c.l.bf16 %v382
        %v576 = vunpack.c.h.bf16 %v382
        %v577 = vunpack.c.l.bf16 %v383
        %v578 = vunpack.c.h.bf16 %v383
        %v579 = vunpack.c.l.bf16 %v384
        %v580 = vunpack.c.h.bf16 %v384
        %v581 = vunpack.c.l.bf16 %v385
        %v582 = vunpack.c.h.bf16 %v385
        %v583 = vunpack.c.l.bf16 %v386
        %v584 = vunpack.c.h.bf16 %v386
        %v585 = vunpack.c.l.bf16 %v387
        %v586 = vunpack.c.h.bf16 %v387
        %v587 = vunpack.c.l.bf16 %v388
        %v588 = vunpack.c.h.bf16 %v388
        %v589 = vunpack.c.l.bf16 %v389
        %v590 = vunpack.c.h.bf16 %v389
        %v591 = vunpack.c.l.bf16 %v390
        %v592 = vunpack.c.h.bf16 %v390
        %v593 = vunpack.c.l.bf16 %v391
        %v594 = vunpack.c.h.bf16 %v391
        %v595 = vunpack.c.l.bf16 %v392
        %v596 = vunpack.c.h.bf16 %v392
        %v597 = vunpack.c.l.bf16 %v393
        %v598 = vunpack.c.h.bf16 %v393
        %v599 = vunpack.c.l.bf16 %v394
        %v600 = vunpack.c.h.bf16 %v394
        %v601 = vunpack.c.l.bf16 %v395
        %v602 = vunpack.c.h.bf16 %v395
        %v603 = vunpack.c.l.bf16 %v396
        %v604 = vunpack.c.h.bf16 %v396
        %v605 = vunpack.c.l.bf16 %v397
        %v606 = vunpack.c.h.bf16 %v397
        %v607 = vunpack.c.l.bf16 %v398
        %v608 = vunpack.c.h.bf16 %v398
        %v609 = vunpack.c.l.bf16 %v399
        %v610 = vunpack.c.h.bf16 %v399
        %v611 = vunpack.c.l.bf16 %v400
        %v612 = vunpack.c.h.bf16 %v400
        %v613 = vunpack.c.l.bf16 %v401
        %v614 = vunpack.c.h.bf16 %v401
        %v615 = vunpack.c.l.bf16 %v402
        %v616 = vunpack.c.h.bf16 %v402
        %v617 = vunpack.c.l.bf16 %v403
        %v618 = vunpack.c.h.bf16 %v403
        %v619 = vunpack.c.l.bf16 %v404
        %v620 = vunpack.c.h.bf16 %v404
        %v621 = vunpack.c.l.bf16 %v405
        %v622 = vunpack.c.h.bf16 %v405
        %v623 = vunpack.c.l.bf16 %v406
        %v624 = vunpack.c.h.bf16 %v406
        %v625 = vunpack.c.l.bf16 %v407
        %v626 = vunpack.c.h.bf16 %v407
        %v627 = vunpack.c.l.bf16 %v408
        %v628 = vunpack.c.h.bf16 %v408
        %v629 = vunpack.c.l.bf16 %v409
        %v630 = vunpack.c.h.bf16 %v409
        %v631 = vunpack.c.l.bf16 %v410
        %v632 = vunpack.c.h.bf16 %v410
        %v633 = vunpack.c.l.bf16 %v411
        %v634 = vunpack.c.h.bf16 %v411
        %v635 = vunpack.c.l.bf16 %v412
        %v636 = vunpack.c.h.bf16 %v412
        %v637 = vunpack.c.l.bf16 %v413
        %v638 = vunpack.c.h.bf16 %v413
        %v639 = vunpack.c.l.bf16 %v414
        %v640 = vunpack.c.h.bf16 %v414
        %v641 = vunpack.c.l.bf16 %v415
        %v642 = vunpack.c.h.bf16 %v415
        %v643 = vunpack.c.l.bf16 %v416
        %v644 = vunpack.c.h.bf16 %v416
        %v645 = vunpack.c.l.bf16 %v417
        %v646 = vunpack.c.h.bf16 %v417
        %v647 = vunpack.c.l.bf16 %v418
        %v648 = vunpack.c.h.bf16 %v418
        %v649 = vunpack.c.l.bf16 %v419
        %v650 = vunpack.c.h.bf16 %v419
        %v651 = vunpack.c.l.bf16 %v420
        %v652 = vunpack.c.h.bf16 %v420
        %v653 = vunpack.c.l.bf16 %v421
        %v654 = vunpack.c.h.bf16 %v421
        %v655 = vunpack.c.l.bf16 %v422
        %v656 = vunpack.c.h.bf16 %v422
        %v657 = vunpack.c.l.bf16 %v423
        %v658 = vunpack.c.h.bf16 %v423
        %v659 = vunpack.c.l.bf16 %v424
        %v660 = vunpack.c.h.bf16 %v424
        %v661 = vunpack.c.l.bf16 %v425
        %v662 = vunpack.c.h.bf16 %v425
        %v663 = vunpack.c.l.bf16 %v426
        %v664 = vunpack.c.h.bf16 %v426
        %v665 = vunpack.c.l.bf16 %v427
        %v666 = vunpack.c.h.bf16 %v427
        %v667 = vunpack.c.l.bf16 %v428
        %v668 = vunpack.c.h.bf16 %v428
        %v669 = vunpack.c.l.bf16 %v429
        %v670 = vunpack.c.h.bf16 %v429
        %v671 = vunpack.c.l.bf16 %v430
        %v672 = vunpack.c.h.bf16 %v430
        %v673 = vunpack.c.l.bf16 %v431
        %v674 = vunpack.c.h.bf16 %v431
        %v675 = vunpack.c.l.bf16 %v432
        %v676 = vunpack.c.h.bf16 %v432
        %v677 = vunpack.c.l.bf16 %v433
        %v678 = vunpack.c.h.bf16 %v433
        %v679 = vunpack.c.l.bf16 %v434
        %v680 = vunpack.c.h.bf16 %v434
        %v681 = vunpack.c.l.bf16 %v435
        %v682 = vunpack.c.h.bf16 %v435
        %v683 = vunpack.c.l.bf16 %v436
        %v684 = vunpack.c.h.bf16 %v436
        %v685 = vunpack.c.l.bf16 %v437
        %v686 = vunpack.c.h.bf16 %v437
        %v687 = vunpack.c.l.bf16 %v438
        %v688 = vunpack.c.h.bf16 %v438
        %v689 = vunpack.c.l.bf16 %v439
        %v690 = vunpack.c.h.bf16 %v439
        %v691 = vunpack.c.l.bf16 %v440
        %v692 = vunpack.c.h.bf16 %v440
        %v693 = vunpack.c.l.bf16 %v441
        %v694 = vunpack.c.h.bf16 %v441
        %v695 = vunpack.c.l.bf16 %v442
        %v696 = vunpack.c.h.bf16 %v442
        %v697 = vunpack.c.l.bf16 %v443
        %v698 = vunpack.c.h.bf16 %v443
        %v699 = vunpack.c.l.bf16 %v444
        %v700 = vunpack.c.h.bf16 %v444
        %v702 = vlaneseq
        %v703 = vshrl.u32 %v702, 7
        %v704 = vsub.s32 0, %v703
        %v705 = vrot.slane %v315, %v704
        %v706 = vlaneseq
        %v707 = vshrl.u32 %v706, 7
        %v708 = vsub.s32 1, %v707
        %v709 = vrot.slane %v315, %v708
        %v710 = vlaneseq
        %v711 = vshrl.u32 %v710, 7
        %v712 = vsub.s32 2, %v711
        %v713 = vrot.slane %v315, %v712
        %v714 = vlaneseq
        %v715 = vshrl.u32 %v714, 7
        %v716 = vsub.s32 3, %v715
        %v717 = vrot.slane %v315, %v716
        %v718 = vlaneseq
        %v719 = vshrl.u32 %v718, 7
        %v720 = vsub.s32 4, %v719
        %v721 = vrot.slane %v315, %v720
        %v722 = vlaneseq
        %v723 = vshrl.u32 %v722, 7
        %v724 = vsub.s32 5, %v723
        %v725 = vrot.slane %v315, %v724
        %v726 = vlaneseq
        %v727 = vshrl.u32 %v726, 7
        %v728 = vsub.s32 6, %v727
        %v729 = vrot.slane %v315, %v728
        %v730 = vlaneseq
        %v731 = vshrl.u32 %v730, 7
        %v732 = vsub.s32 7, %v731
        %v733 = vrot.slane %v315, %v732
        %742 = vmatprep.subr.mxu0 %v476
        %743 = vmatpush1.msra.mxu0 %v475
        %744 = vmatprep.subr.mxu0 %v474
        %745 = vmatpush1.msra.mxu0 %v473
        %746 = vmatprep.subr.mxu0 %v472
        %747 = vmatpush1.msra.mxu0 %v471
        %748 = vmatprep.subr.mxu0 %v470
        %749 = vmatpush1.msra.mxu0 %v469
        %750 = vmatprep.subr.mxu0 %v468
        %751 = vmatpush1.msra.mxu0 %v467
        %752 = vmatprep.subr.mxu0 %v466
        %753 = vmatpush1.msra.mxu0 %v465
        %754 = vmatprep.subr.mxu0 %v464
        %755 = vmatpush1.msra.mxu0 %v463
        %756 = vmatprep.subr.mxu0 %v462
        %757 = vmatpush1.msra.mxu0 %v461
        %758 = vmatprep.subr.mxu0 %v460
        %759 = vmatpush1.msra.mxu0 %v459
        %760 = vmatprep.subr.mxu0 %v458
        %761 = vmatpush1.msra.mxu0 %v457
        %762 = vmatprep.subr.mxu0 %v456
        %763 = vmatpush1.msra.mxu0 %v455
        %764 = vmatprep.subr.mxu0 %v454
        %765 = vmatpush1.msra.mxu0 %v453
        %766 = vmatprep.subr.mxu0 %v452
        %767 = vmatpush1.msra.mxu0 %v451
        %768 = vmatprep.subr.mxu0 %v450
        %769 = vmatpush1.msra.mxu0 %v449
        %770 = vmatprep.subr.mxu0 %v448
        %771 = vmatpush1.msra.mxu0 %v447
        %772 = vmatprep.subr.mxu0 %v446
        %773 = vmatpush1.msra.mxu0 %v445
        %774 = vmatprep.subr.mxu0 %v508
        %775 = vmatpush2.msra.mxu0 %v507
        %776 = vmatprep.subr.mxu0 %v506
        %777 = vmatpush2.msra.mxu0 %v505
        %778 = vmatprep.subr.mxu0 %v504
        %779 = vmatpush2.msra.mxu0 %v503
        %780 = vmatprep.subr.mxu0 %v502
        %781 = vmatpush2.msra.mxu0 %v501
        %782 = vmatprep.subr.mxu0 %v500
        %783 = vmatpush2.msra.mxu0 %v499
        %784 = vmatprep.subr.mxu0 %v498
        %785 = vmatpush2.msra.mxu0 %v497
        %786 = vmatprep.subr.mxu0 %v496
        %787 = vmatpush2.msra.mxu0 %v495
        %788 = vmatprep.subr.mxu0 %v494
        %789 = vmatpush2.msra.mxu0 %v493
        %790 = vmatprep.subr.mxu0 %v492
        %791 = vmatpush2.msra.mxu0 %v491
        %792 = vmatprep.subr.mxu0 %v490
        %793 = vmatpush2.msra.mxu0 %v489
        %794 = vmatprep.subr.mxu0 %v488
        %795 = vmatpush2.msra.mxu0 %v487
        %796 = vmatprep.subr.mxu0 %v486
        %797 = vmatpush2.msra.mxu0 %v485
        %798 = vmatprep.subr.mxu0 %v484
        %799 = vmatpush2.msra.mxu0 %v483
        %800 = vmatprep.subr.mxu0 %v482
        %801 = vmatpush2.msra.mxu0 %v481
        %802 = vmatprep.subr.mxu0 %v480
        %803 = vmatpush2.msra.mxu0 %v479
        %804 = vmatprep.subr.mxu0 %v478
        %805 = vmatpush2.msra.mxu0 %v477
        %806 = vmatprep.mubr.f32.mxu0 %v709
        %807 = vmatmul.mubr.f32.gmra.mxu0 %v705
        %v808 = vpop.f32.mrf.mxu0
        %v809 = vadd.f32 0.0, %v808
        %v810 = vpop.f32.mrf.mxu0
        %v811 = vadd.f32 0.0, %v810
        %812 = vdwg.mxu0
        %813 = vmatprep.subr.mxu0 %v540
        %814 = vmatpush1.msra.mxu0 %v539
        %815 = vmatprep.subr.mxu0 %v538
        %816 = vmatpush1.msra.mxu0 %v537
        %817 = vmatprep.subr.mxu0 %v536
        %818 = vmatpush1.msra.mxu0 %v535
        %819 = vmatprep.subr.mxu0 %v534
        %820 = vmatpush1.msra.mxu0 %v533
        %821 = vmatprep.subr.mxu0 %v532
        %822 = vmatpush1.msra.mxu0 %v531
        %823 = vmatprep.subr.mxu0 %v530
        %824 = vmatpush1.msra.mxu0 %v529
        %825 = vmatprep.subr.mxu0 %v528
        %826 = vmatpush1.msra.mxu0 %v527
        %827 = vmatprep.subr.mxu0 %v526
        %828 = vmatpush1.msra.mxu0 %v525
        %829 = vmatprep.subr.mxu0 %v524
        %830 = vmatpush1.msra.mxu0 %v523
        %831 = vmatprep.subr.mxu0 %v522
        %832 = vmatpush1.msra.mxu0 %v521
        %833 = vmatprep.subr.mxu0 %v520
        %834 = vmatpush1.msra.mxu0 %v519
        %835 = vmatprep.subr.mxu0 %v518
        %836 = vmatpush1.msra.mxu0 %v517
        %837 = vmatprep.subr.mxu0 %v516
        %838 = vmatpush1.msra.mxu0 %v515
        %839 = vmatprep.subr.mxu0 %v514
        %840 = vmatpush1.msra.mxu0 %v513
        %841 = vmatprep.subr.mxu0 %v512
        %842 = vmatpush1.msra.mxu0 %v511
        %843 = vmatprep.subr.mxu0 %v510
        %844 = vmatpush1.msra.mxu0 %v509
        %845 = vmatprep.subr.mxu0 %v572
        %846 = vmatpush2.msra.mxu0 %v571
        %847 = vmatprep.subr.mxu0 %v570
        %848 = vmatpush2.msra.mxu0 %v569
        %849 = vmatprep.subr.mxu0 %v568
        %850 = vmatpush2.msra.mxu0 %v567
        %851 = vmatprep.subr.mxu0 %v566
        %852 = vmatpush2.msra.mxu0 %v565
        %853 = vmatprep.subr.mxu0 %v564
        %854 = vmatpush2.msra.mxu0 %v563
        %855 = vmatprep.subr.mxu0 %v562
        %856 = vmatpush2.msra.mxu0 %v561
        %857 = vmatprep.subr.mxu0 %v560
        %858 = vmatpush2.msra.mxu0 %v559
        %859 = vmatprep.subr.mxu0 %v558
        %860 = vmatpush2.msra.mxu0 %v557
        %861 = vmatprep.subr.mxu0 %v556
        %862 = vmatpush2.msra.mxu0 %v555
        %863 = vmatprep.subr.mxu0 %v554
        %864 = vmatpush2.msra.mxu0 %v553
        %865 = vmatprep.subr.mxu0 %v552
        %866 = vmatpush2.msra.mxu0 %v551
        %867 = vmatprep.subr.mxu0 %v550
        %868 = vmatpush2.msra.mxu0 %v549
        %869 = vmatprep.subr.mxu0 %v548
        %870 = vmatpush2.msra.mxu0 %v547
        %871 = vmatprep.subr.mxu0 %v546
        %872 = vmatpush2.msra.mxu0 %v545
        %873 = vmatprep.subr.mxu0 %v544
        %874 = vmatpush2.msra.mxu0 %v543
        %875 = vmatprep.subr.mxu0 %v542
        %876 = vmatpush2.msra.mxu0 %v541
        %877 = vmatprep.mubr.f32.mxu0 %v717
        %878 = vmatmul.mubr.f32.gmra.mxu0 %v713
        %v879 = vpop.f32.mrf.mxu0
        %v880 = vadd.f32 %v809, %v879
        %v881 = vpop.f32.mrf.mxu0
        %v882 = vadd.f32 %v811, %v881
        %883 = vdwg.mxu0
        %884 = vmatprep.subr.mxu0 %v604
        %885 = vmatpush1.msra.mxu0 %v603
        %886 = vmatprep.subr.mxu0 %v602
        %887 = vmatpush1.msra.mxu0 %v601
        %888 = vmatprep.subr.mxu0 %v600
        %889 = vmatpush1.msra.mxu0 %v599
        %890 = vmatprep.subr.mxu0 %v598
        %891 = vmatpush1.msra.mxu0 %v597
        %892 = vmatprep.subr.mxu0 %v596
        %893 = vmatpush1.msra.mxu0 %v595
        %894 = vmatprep.subr.mxu0 %v594
        %895 = vmatpush1.msra.mxu0 %v593
        %896 = vmatprep.subr.mxu0 %v592
        %897 = vmatpush1.msra.mxu0 %v591
        %898 = vmatprep.subr.mxu0 %v590
        %899 = vmatpush1.msra.mxu0 %v589
        %900 = vmatprep.subr.mxu0 %v588
        %901 = vmatpush1.msra.mxu0 %v587
        %902 = vmatprep.subr.mxu0 %v586
        %903 = vmatpush1.msra.mxu0 %v585
        %904 = vmatprep.subr.mxu0 %v584
        %905 = vmatpush1.msra.mxu0 %v583
        %906 = vmatprep.subr.mxu0 %v582
        %907 = vmatpush1.msra.mxu0 %v581
        %908 = vmatprep.subr.mxu0 %v580
        %909 = vmatpush1.msra.mxu0 %v579
        %910 = vmatprep.subr.mxu0 %v578
        %911 = vmatpush1.msra.mxu0 %v577
        %912 = vmatprep.subr.mxu0 %v576
        %913 = vmatpush1.msra.mxu0 %v575
        %914 = vmatprep.subr.mxu0 %v574
        %915 = vmatpush1.msra.mxu0 %v573
        %916 = vmatprep.subr.mxu0 %v636
        %917 = vmatpush2.msra.mxu0 %v635
        %918 = vmatprep.subr.mxu0 %v634
        %919 = vmatpush2.msra.mxu0 %v633
        %920 = vmatprep.subr.mxu0 %v632
        %921 = vmatpush2.msra.mxu0 %v631
        %922 = vmatprep.subr.mxu0 %v630
        %923 = vmatpush2.msra.mxu0 %v629
        %924 = vmatprep.subr.mxu0 %v628
        %925 = vmatpush2.msra.mxu0 %v627
        %926 = vmatprep.subr.mxu0 %v626
        %927 = vmatpush2.msra.mxu0 %v625
        %928 = vmatprep.subr.mxu0 %v624
        %929 = vmatpush2.msra.mxu0 %v623
        %930 = vmatprep.subr.mxu0 %v622
        %931 = vmatpush2.msra.mxu0 %v621
        %932 = vmatprep.subr.mxu0 %v620
        %933 = vmatpush2.msra.mxu0 %v619
        %934 = vmatprep.subr.mxu0 %v618
        %935 = vmatpush2.msra.mxu0 %v617
        %936 = vmatprep.subr.mxu0 %v616
        %937 = vmatpush2.msra.mxu0 %v615
        %938 = vmatprep.subr.mxu0 %v614
        %939 = vmatpush2.msra.mxu0 %v613
        %940 = vmatprep.subr.mxu0 %v612
        %941 = vmatpush2.msra.mxu0 %v611
        %942 = vmatprep.subr.mxu0 %v610
        %943 = vmatpush2.msra.mxu0 %v609
        %944 = vmatprep.subr.mxu0 %v608
        %945 = vmatpush2.msra.mxu0 %v607
        %946 = vmatprep.subr.mxu0 %v606
        %947 = vmatpush2.msra.mxu0 %v605
        %948 = vmatprep.mubr.f32.mxu0 %v725
        %949 = vmatmul.mubr.f32.gmra.mxu0 %v721
        %v950 = vpop.f32.mrf.mxu0
        %v951 = vadd.f32 %v880, %v950
        %v952 = vpop.f32.mrf.mxu0
        %v953 = vadd.f32 %v882, %v952
        %954 = vdwg.mxu0
        %955 = vmatprep.subr.mxu0 %v668
        %956 = vmatpush1.msra.mxu0 %v667
        %957 = vmatprep.subr.mxu0 %v666
        %958 = vmatpush1.msra.mxu0 %v665
        %959 = vmatprep.subr.mxu0 %v664
        %960 = vmatpush1.msra.mxu0 %v663
        %961 = vmatprep.subr.mxu0 %v662
        %962 = vmatpush1.msra.mxu0 %v661
        %963 = vmatprep.subr.mxu0 %v660
        %964 = vmatpush1.msra.mxu0 %v659
        %965 = vmatprep.subr.mxu0 %v658
        %966 = vmatpush1.msra.mxu0 %v657
        %967 = vmatprep.subr.mxu0 %v656
        %968 = vmatpush1.msra.mxu0 %v655
        %969 = vmatprep.subr.mxu0 %v654
        %970 = vmatpush1.msra.mxu0 %v653
        %971 = vmatprep.subr.mxu0 %v652
        %972 = vmatpush1.msra.mxu0 %v651
        %973 = vmatprep.subr.mxu0 %v650
        %974 = vmatpush1.msra.mxu0 %v649
        %975 = vmatprep.subr.mxu0 %v648
        %976 = vmatpush1.msra.mxu0 %v647
        %977 = vmatprep.subr.mxu0 %v646
        %978 = vmatpush1.msra.mxu0 %v645
        %979 = vmatprep.subr.mxu0 %v644
        %980 = vmatpush1.msra.mxu0 %v643
        %981 = vmatprep.subr.mxu0 %v642
        %982 = vmatpush1.msra.mxu0 %v641
        %983 = vmatprep.subr.mxu0 %v640
        %984 = vmatpush1.msra.mxu0 %v639
        %985 = vmatprep.subr.mxu0 %v638
        %986 = vmatpush1.msra.mxu0 %v637
        %987 = vmatprep.subr.mxu0 %v700
        %988 = vmatpush2.msra.mxu0 %v699
        %989 = vmatprep.subr.mxu0 %v698
        %990 = vmatpush2.msra.mxu0 %v697
        %991 = vmatprep.subr.mxu0 %v696
        %992 = vmatpush2.msra.mxu0 %v695
        %993 = vmatprep.subr.mxu0 %v694
        %994 = vmatpush2.msra.mxu0 %v693
        %995 = vmatprep.subr.mxu0 %v692
        %996 = vmatpush2.msra.mxu0 %v691
        %997 = vmatprep.subr.mxu0 %v690
        %998 = vmatpush2.msra.mxu0 %v689
        %999 = vmatprep.subr.mxu0 %v688
        %1000 = vmatpush2.msra.mxu0 %v687
        %1001 = vmatprep.subr.mxu0 %v686
        %1002 = vmatpush2.msra.mxu0 %v685
        %1003 = vmatprep.subr.mxu0 %v684
        %1004 = vmatpush2.msra.mxu0 %v683
        %1005 = vmatprep.subr.mxu0 %v682
        %1006 = vmatpush2.msra.mxu0 %v681
        %1007 = vmatprep.subr.mxu0 %v680
        %1008 = vmatpush2.msra.mxu0 %v679
        %1009 = vmatprep.subr.mxu0 %v678
        %1010 = vmatpush2.msra.mxu0 %v677
        %1011 = vmatprep.subr.mxu0 %v676
        %1012 = vmatpush2.msra.mxu0 %v675
        %1013 = vmatprep.subr.mxu0 %v674
        %1014 = vmatpush2.msra.mxu0 %v673
        %1015 = vmatprep.subr.mxu0 %v672
        %1016 = vmatpush2.msra.mxu0 %v671
        %1017 = vmatprep.subr.mxu0 %v670
        %1018 = vmatpush2.msra.mxu0 %v669
        %1019 = vmatprep.mubr.f32.mxu0 %v733
        %1020 = vmatmul.mubr.f32.gmra.mxu0 %v729
        %v1021 = vpop.f32.mrf.mxu0
        %v1022 = vadd.f32 %v951, %v1021
        %v1023 = vpop.f32.mrf.mxu0
        %v1024 = vadd.f32 %v953, %v1023
        %1025 = vdwg.mxu0
        %v1028 = vcombine.low %v1022, %v1024
        %v1030 = vunpack.c.l.s4 1966171168
        %v1031 = vunpack.c.0.s8 %v1030
        %v1032 = vlaneseq
        %v1033 = vshrl.u32 %v1032, 7
        %v1034 = vsub.s32 %v1031, %v1033
        %v1035 = vrot.slane %v1028, %v1034
        %v1037 = vunpack.c.l.s4 1966171168
        %v1038 = vunpack.c.0.s8 %v1037
        %v1039 = vlaneseq
        %v1040 = vshrl.u32 %v1039, 7
        %v1041 = vsub.s32 %v1038, %v1040
        %v1042 = vrot.slane %v1035, %v1041
        %v1044 = vadd.f32 %v316, %v1042
        %v1045 = vlaneseq
        %vm1046 = vcmp.ge.s32.totalorder %v1045, 0
        %vm1047 = vcmp.lt.s32.totalorder %v1045, 256
        %vm1048 = vmand %vm1046, %vm1047
        %1049 = vst.msk [vmem:[#allocation2] sm:$0x3] %vm1048, %v1044
        %p1050 = scmp.eq.s32.totalorder %s23, 1
        // Predicated region
        $region61: #{tpu_custom_call.1} parent=47 // pred_check
          %p1051 = pneg %p1050
        $region62: #{tpu_custom_call.1} parent=47 // pred_check_branch
          %1053 = sbr.rel (%p1051) target = $region64
        $region63: #{tpu_custom_call.1} parent=47 // pred_region
          %v1054 = vld [vmem:[#allocation2] sm:$0x3]
          %v1055 = vld [vmem:[%s2] sm:$0x3]
          %v1056 = vadd.f32 %v1054, %v1055
          %v1057 = vmax.f32 %v1056, 0.0
          %v1058 = vld [vmem:[%s3] sm:$0xff]
          %v1059 = vld [vmem:[%s3 + $0x8] sm:$0xff]
          %v1060 = vld [vmem:[%s3 + $0x10] sm:$0xff]
          %v1061 = vld [vmem:[%s3 + $0x18] sm:$0xff]
          %v1062 = vld [vmem:[%s3 + $0x20] sm:$0xff]
          %v1063 = vld [vmem:[%s3 + $0x28] sm:$0xff]
          %v1064 = vld [vmem:[%s3 + $0x30] sm:$0xff]
          %v1065 = vld [vmem:[%s3 + $0x38] sm:$0xff]
          %v1066 = vld [vmem:[%s3 + $0x40] sm:$0xff]
          %v1067 = vld [vmem:[%s3 + $0x48] sm:$0xff]
          %v1068 = vld [vmem:[%s3 + $0x50] sm:$0xff]
          %v1069 = vld [vmem:[%s3 + $0x58] sm:$0xff]
          %v1070 = vld [vmem:[%s3 + $0x60] sm:$0xff]
          %v1071 = vld [vmem:[%s3 + $0x68] sm:$0xff]
          %v1072 = vld [vmem:[%s3 + $0x70] sm:$0xff]
          %v1073 = vld [vmem:[%s3 + $0x78] sm:$0xff]
          %v1074 = vld [vmem:[%s3 + $0x80] sm:$0xff]
          %v1075 = vld [vmem:[%s3 + $0x88] sm:$0xff]
          %v1076 = vld [vmem:[%s3 + $0x90] sm:$0xff]
          %v1077 = vld [vmem:[%s3 + $0x98] sm:$0xff]
          %v1078 = vld [vmem:[%s3 + $0xa0] sm:$0xff]
          %v1079 = vld [vmem:[%s3 + $0xa8] sm:$0xff]
          %v1080 = vld [vmem:[%s3 + $0xb0] sm:$0xff]
          %v1081 = vld [vmem:[%s3 + $0xb8] sm:$0xff]
          %v1082 = vld [vmem:[%s3 + $0xc0] sm:$0xff]
          %v1083 = vld [vmem:[%s3 + $0xc8] sm:$0xff]
          %v1084 = vld [vmem:[%s3 + $0xd0] sm:$0xff]
          %v1085 = vld [vmem:[%s3 + $0xd8] sm:$0xff]
          %v1086 = vld [vmem:[%s3 + $0xe0] sm:$0xff]
          %v1087 = vld [vmem:[%s3 + $0xe8] sm:$0xff]
          %v1088 = vld [vmem:[%s3 + $0xf0] sm:$0xff]
          %v1089 = vld [vmem:[%s3 + $0xf8] sm:$0xff]
          %v1090 = vld [vmem:[%s4] sm:$0x1]
          %v1092 = vlaneseq
          %v1093 = vshrl.u32 %v1092, 7
          %v1094 = vsub.s32 0, %v1093
          %v1095 = vrot.slane %v1057, %v1094
          %v1096 = vlaneseq
          %v1097 = vshrl.u32 %v1096, 7
          %v1098 = vsub.s32 1, %v1097
          %v1099 = vrot.slane %v1057, %v1098
          %1102 = vmatprep.subr.mxu0 0.0
          %1103 = vmatpush1.msra.mxu0 %v1073
          %1104 = vmatprep.subr.mxu0 0.0
          %1105 = vmatpush1.msra.mxu0 %v1072
          %1106 = vmatprep.subr.mxu0 0.0
          %1107 = vmatpush1.msra.mxu0 %v1071
          %1108 = vmatprep.subr.mxu0 0.0
          %1109 = vmatpush1.msra.mxu0 %v1070
          %1110 = vmatprep.subr.mxu0 0.0
          %1111 = vmatpush1.msra.mxu0 %v1069
          %1112 = vmatprep.subr.mxu0 0.0
          %1113 = vmatpush1.msra.mxu0 %v1068
          %1114 = vmatprep.subr.mxu0 0.0
          %1115 = vmatpush1.msra.mxu0 %v1067
          %1116 = vmatprep.subr.mxu0 0.0
          %1117 = vmatpush1.msra.mxu0 %v1066
          %1118 = vmatprep.subr.mxu0 0.0
          %1119 = vmatpush1.msra.mxu0 %v1065
          %1120 = vmatprep.subr.mxu0 0.0
          %1121 = vmatpush1.msra.mxu0 %v1064
          %1122 = vmatprep.subr.mxu0 0.0
          %1123 = vmatpush1.msra.mxu0 %v1063
          %1124 = vmatprep.subr.mxu0 0.0
          %1125 = vmatpush1.msra.mxu0 %v1062
          %1126 = vmatprep.subr.mxu0 0.0
          %1127 = vmatpush1.msra.mxu0 %v1061
          %1128 = vmatprep.subr.mxu0 0.0
          %1129 = vmatpush1.msra.mxu0 %v1060
          %1130 = vmatprep.subr.mxu0 0.0
          %1131 = vmatpush1.msra.mxu0 %v1059
          %1132 = vmatprep.subr.mxu0 0.0
          %1133 = vmatpush1.msra.mxu0 %v1058
          %1134 = vmatprep.subr.mxu0 0.0
          %1135 = vmatpush2.msra.mxu0 %v1089
          %1136 = vmatprep.subr.mxu0 0.0
          %1137 = vmatpush2.msra.mxu0 %v1088
          %1138 = vmatprep.subr.mxu0 0.0
          %1139 = vmatpush2.msra.mxu0 %v1087
          %1140 = vmatprep.subr.mxu0 0.0
          %1141 = vmatpush2.msra.mxu0 %v1086
          %1142 = vmatprep.subr.mxu0 0.0
          %1143 = vmatpush2.msra.mxu0 %v1085
          %1144 = vmatprep.subr.mxu0 0.0
          %1145 = vmatpush2.msra.mxu0 %v1084
          %1146 = vmatprep.subr.mxu0 0.0
          %1147 = vmatpush2.msra.mxu0 %v1083
          %1148 = vmatprep.subr.mxu0 0.0
          %1149 = vmatpush2.msra.mxu0 %v1082
          %1150 = vmatprep.subr.mxu0 0.0
          %1151 = vmatpush2.msra.mxu0 %v1081
          %1152 = vmatprep.subr.mxu0 0.0
          %1153 = vmatpush2.msra.mxu0 %v1080
          %1154 = vmatprep.subr.mxu0 0.0
          %1155 = vmatpush2.msra.mxu0 %v1079
          %1156 = vmatprep.subr.mxu0 0.0
          %1157 = vmatpush2.msra.mxu0 %v1078
          %1158 = vmatprep.subr.mxu0 0.0
          %1159 = vmatpush2.msra.mxu0 %v1077
          %1160 = vmatprep.subr.mxu0 0.0
          %1161 = vmatpush2.msra.mxu0 %v1076
          %1162 = vmatprep.subr.mxu0 0.0
          %1163 = vmatpush2.msra.mxu0 %v1075
          %1164 = vmatprep.subr.mxu0 0.0
          %1165 = vmatpush2.msra.mxu0 %v1074
          %1166 = vmatprep.mubr.f32.mxu0 %v1099
          %1167 = vmatmul.mubr.f32.gmra.mxu0 %v1095
          %v1168 = vpop.f32.mrf.mxu0
          %v1169 = vadd.f32 %v1090, %v1168
          %v1170 = vpop.f32.mrf.mxu0
          %1171 = vdwg.mxu0
          %v1172 = vmax.f32 %v1169, 0.0
          %v1173 = vld [vmem:[#allocation6] sm:$0xff]
          %v1174 = vld [vmem:[#allocation6 + $0x8] sm:$0xff]
          %v1175 = vld [vmem:[#allocation6 + $0x10] sm:$0xff]
          %v1176 = vld [vmem:[#allocation6 + $0x18] sm:$0xff]
          %v1177 = vld [vmem:[#allocation6 + $0x20] sm:$0xff]
          %v1178 = vld [vmem:[#allocation6 + $0x28] sm:$0xff]
          %v1179 = vld [vmem:[#allocation6 + $0x30] sm:$0xff]
          %v1180 = vld [vmem:[#allocation6 + $0x38] sm:$0xff]
          %v1181 = vld [vmem:[#allocation6 + $0x40] sm:$0xff]
          %v1182 = vld [vmem:[#allocation6 + $0x48] sm:$0xff]
          %v1183 = vld [vmem:[#allocation6 + $0x50] sm:$0xff]
          %v1184 = vld [vmem:[#allocation6 + $0x58] sm:$0xff]
          %v1185 = vld [vmem:[#allocation6 + $0x60] sm:$0xff]
          %v1186 = vld [vmem:[#allocation6 + $0x68] sm:$0xff]
          %v1187 = vld [vmem:[#allocation6 + $0x70] sm:$0xff]
          %v1188 = vld [vmem:[#allocation6 + $0x78] sm:$0xff]
          %v1189 = vld [vmem:[#allocation6 + $0x80] sm:$0xff]
          %v1190 = vld [vmem:[#allocation6 + $0x88] sm:$0xff]
          %v1191 = vld [vmem:[#allocation6 + $0x90] sm:$0xff]
          %v1192 = vld [vmem:[#allocation6 + $0x98] sm:$0xff]
          %v1193 = vld [vmem:[#allocation6 + $0xa0] sm:$0xff]
          %v1194 = vld [vmem:[#allocation6 + $0xa8] sm:$0xff]
          %v1195 = vld [vmem:[#allocation6 + $0xb0] sm:$0xff]
          %v1196 = vld [vmem:[#allocation6 + $0xb8] sm:$0xff]
          %v1197 = vld [vmem:[#allocation6 + $0xc0] sm:$0xff]
          %v1198 = vld [vmem:[#allocation6 + $0xc8] sm:$0xff]
          %v1199 = vld [vmem:[#allocation6 + $0xd0] sm:$0xff]
          %v1200 = vld [vmem:[#allocation6 + $0xd8] sm:$0xff]
          %v1201 = vld [vmem:[#allocation6 + $0xe0] sm:$0xff]
          %v1202 = vld [vmem:[#allocation6 + $0xe8] sm:$0xff]
          %v1203 = vld [vmem:[#allocation6 + $0xf0] sm:$0xff]
          %v1204 = vld [vmem:[#allocation6 + $0xf8] sm:$0xff]
          %v1205 = vld [vmem:[#allocation6 + $0x100] sm:$0xff]
          %v1206 = vld [vmem:[#allocation6 + $0x108] sm:$0xff]
          %v1207 = vld [vmem:[#allocation6 + $0x110] sm:$0xff]
          %v1208 = vld [vmem:[#allocation6 + $0x118] sm:$0xff]
          %v1209 = vld [vmem:[#allocation6 + $0x120] sm:$0xff]
          %v1210 = vld [vmem:[#allocation6 + $0x128] sm:$0xff]
          %v1211 = vld [vmem:[#allocation6 + $0x130] sm:$0xff]
          %v1212 = vld [vmem:[#allocation6 + $0x138] sm:$0xff]
          %v1213 = vld [vmem:[#allocation6 + $0x140] sm:$0xff]
          %v1214 = vld [vmem:[#allocation6 + $0x148] sm:$0xff]
          %v1215 = vld [vmem:[#allocation6 + $0x150] sm:$0xff]
          %v1216 = vld [vmem:[#allocation6 + $0x158] sm:$0xff]
          %v1217 = vld [vmem:[#allocation6 + $0x160] sm:$0xff]
          %v1218 = vld [vmem:[#allocation6 + $0x168] sm:$0xff]
          %v1219 = vld [vmem:[#allocation6 + $0x170] sm:$0xff]
          %v1220 = vld [vmem:[#allocation6 + $0x178] sm:$0xff]
          %v1221 = vld [vmem:[#allocation6 + $0x180] sm:$0xff]
          %v1222 = vld [vmem:[#allocation6 + $0x188] sm:$0xff]
          %v1223 = vld [vmem:[#allocation6 + $0x190] sm:$0xff]
          %v1224 = vld [vmem:[#allocation6 + $0x198] sm:$0xff]
          %v1225 = vld [vmem:[#allocation6 + $0x1a0] sm:$0xff]
          %v1226 = vld [vmem:[#allocation6 + $0x1a8] sm:$0xff]
          %v1227 = vld [vmem:[#allocation6 + $0x1b0] sm:$0xff]
          %v1228 = vld [vmem:[#allocation6 + $0x1b8] sm:$0xff]
          %v1229 = vld [vmem:[#allocation6 + $0x1c0] sm:$0xff]
          %v1230 = vld [vmem:[#allocation6 + $0x1c8] sm:$0xff]
          %v1231 = vld [vmem:[#allocation6 + $0x1d0] sm:$0xff]
          %v1232 = vld [vmem:[#allocation6 + $0x1d8] sm:$0xff]
          %v1233 = vld [vmem:[#allocation6 + $0x1e0] sm:$0xff]
          %v1234 = vld [vmem:[#allocation6 + $0x1e8] sm:$0xff]
          %v1235 = vld [vmem:[#allocation6 + $0x1f0] sm:$0xff]
          %v1236 = vld [vmem:[#allocation6 + $0x1f8] sm:$0xff]
          %v1237 = vunpack.c.l.bf16 %v1173
          %v1238 = vunpack.c.h.bf16 %v1173
          %v1239 = vunpack.c.l.bf16 %v1174
          %v1240 = vunpack.c.h.bf16 %v1174
          %v1241 = vunpack.c.l.bf16 %v1175
          %v1242 = vunpack.c.h.bf16 %v1175
          %v1243 = vunpack.c.l.bf16 %v1176
          %v1244 = vunpack.c.h.bf16 %v1176
          %v1245 = vunpack.c.l.bf16 %v1177
          %v1246 = vunpack.c.h.bf16 %v1177
          %v1247 = vunpack.c.l.bf16 %v1178
          %v1248 = vunpack.c.h.bf16 %v1178
          %v1249 = vunpack.c.l.bf16 %v1179
          %v1250 = vunpack.c.h.bf16 %v1179
          %v1251 = vunpack.c.l.bf16 %v1180
          %v1252 = vunpack.c.h.bf16 %v1180
          %v1253 = vunpack.c.l.bf16 %v1181
          %v1254 = vunpack.c.h.bf16 %v1181
          %v1255 = vunpack.c.l.bf16 %v1182
          %v1256 = vunpack.c.h.bf16 %v1182
          %v1257 = vunpack.c.l.bf16 %v1183
          %v1258 = vunpack.c.h.bf16 %v1183
          %v1259 = vunpack.c.l.bf16 %v1184
          %v1260 = vunpack.c.h.bf16 %v1184
          %v1261 = vunpack.c.l.bf16 %v1185
          %v1262 = vunpack.c.h.bf16 %v1185
          %v1263 = vunpack.c.l.bf16 %v1186
          %v1264 = vunpack.c.h.bf16 %v1186
          %v1265 = vunpack.c.l.bf16 %v1187
          %v1266 = vunpack.c.h.bf16 %v1187
          %v1267 = vunpack.c.l.bf16 %v1188
          %v1268 = vunpack.c.h.bf16 %v1188
          %v1269 = vunpack.c.l.bf16 %v1189
          %v1270 = vunpack.c.h.bf16 %v1189
          %v1271 = vunpack.c.l.bf16 %v1190
          %v1272 = vunpack.c.h.bf16 %v1190
          %v1273 = vunpack.c.l.bf16 %v1191
          %v1274 = vunpack.c.h.bf16 %v1191
          %v1275 = vunpack.c.l.bf16 %v1192
          %v1276 = vunpack.c.h.bf16 %v1192
          %v1277 = vunpack.c.l.bf16 %v1193
          %v1278 = vunpack.c.h.bf16 %v1193
          %v1279 = vunpack.c.l.bf16 %v1194
          %v1280 = vunpack.c.h.bf16 %v1194
          %v1281 = vunpack.c.l.bf16 %v1195
          %v1282 = vunpack.c.h.bf16 %v1195
          %v1283 = vunpack.c.l.bf16 %v1196
          %v1284 = vunpack.c.h.bf16 %v1196
          %v1285 = vunpack.c.l.bf16 %v1197
          %v1286 = vunpack.c.h.bf16 %v1197
          %v1287 = vunpack.c.l.bf16 %v1198
          %v1288 = vunpack.c.h.bf16 %v1198
          %v1289 = vunpack.c.l.bf16 %v1199
          %v1290 = vunpack.c.h.bf16 %v1199
          %v1291 = vunpack.c.l.bf16 %v1200
          %v1292 = vunpack.c.h.bf16 %v1200
          %v1293 = vunpack.c.l.bf16 %v1201
          %v1294 = vunpack.c.h.bf16 %v1201
          %v1295 = vunpack.c.l.bf16 %v1202
          %v1296 = vunpack.c.h.bf16 %v1202
          %v1297 = vunpack.c.l.bf16 %v1203
          %v1298 = vunpack.c.h.bf16 %v1203
          %v1299 = vunpack.c.l.bf16 %v1204
          %v1300 = vunpack.c.h.bf16 %v1204
          %v1301 = vunpack.c.l.bf16 %v1205
          %v1302 = vunpack.c.h.bf16 %v1205
          %v1303 = vunpack.c.l.bf16 %v1206
          %v1304 = vunpack.c.h.bf16 %v1206
          %v1305 = vunpack.c.l.bf16 %v1207
          %v1306 = vunpack.c.h.bf16 %v1207
          %v1307 = vunpack.c.l.bf16 %v1208
          %v1308 = vunpack.c.h.bf16 %v1208
          %v1309 = vunpack.c.l.bf16 %v1209
          %v1310 = vunpack.c.h.bf16 %v1209
          %v1311 = vunpack.c.l.bf16 %v1210
          %v1312 = vunpack.c.h.bf16 %v1210
          %v1313 = vunpack.c.l.bf16 %v1211
          %v1314 = vunpack.c.h.bf16 %v1211
          %v1315 = vunpack.c.l.bf16 %v1212
          %v1316 = vunpack.c.h.bf16 %v1212
          %v1317 = vunpack.c.l.bf16 %v1213
          %v1318 = vunpack.c.h.bf16 %v1213
          %v1319 = vunpack.c.l.bf16 %v1214
          %v1320 = vunpack.c.h.bf16 %v1214
          %v1321 = vunpack.c.l.bf16 %v1215
          %v1322 = vunpack.c.h.bf16 %v1215
          %v1323 = vunpack.c.l.bf16 %v1216
          %v1324 = vunpack.c.h.bf16 %v1216
          %v1325 = vunpack.c.l.bf16 %v1217
          %v1326 = vunpack.c.h.bf16 %v1217
          %v1327 = vunpack.c.l.bf16 %v1218
          %v1328 = vunpack.c.h.bf16 %v1218
          %v1329 = vunpack.c.l.bf16 %v1219
          %v1330 = vunpack.c.h.bf16 %v1219
          %v1331 = vunpack.c.l.bf16 %v1220
          %v1332 = vunpack.c.h.bf16 %v1220
          %v1333 = vunpack.c.l.bf16 %v1221
          %v1334 = vunpack.c.h.bf16 %v1221
          %v1335 = vunpack.c.l.bf16 %v1222
          %v1336 = vunpack.c.h.bf16 %v1222
          %v1337 = vunpack.c.l.bf16 %v1223
          %v1338 = vunpack.c.h.bf16 %v1223
          %v1339 = vunpack.c.l.bf16 %v1224
          %v1340 = vunpack.c.h.bf16 %v1224
          %v1341 = vunpack.c.l.bf16 %v1225
          %v1342 = vunpack.c.h.bf16 %v1225
          %v1343 = vunpack.c.l.bf16 %v1226
          %v1344 = vunpack.c.h.bf16 %v1226
          %v1345 = vunpack.c.l.bf16 %v1227
          %v1346 = vunpack.c.h.bf16 %v1227
          %v1347 = vunpack.c.l.bf16 %v1228
          %v1348 = vunpack.c.h.bf16 %v1228
          %v1349 = vunpack.c.l.bf16 %v1229
          %v1350 = vunpack.c.h.bf16 %v1229
          %v1351 = vunpack.c.l.bf16 %v1230
          %v1352 = vunpack.c.h.bf16 %v1230
          %v1353 = vunpack.c.l.bf16 %v1231
          %v1354 = vunpack.c.h.bf16 %v1231
          %v1355 = vunpack.c.l.bf16 %v1232
          %v1356 = vunpack.c.h.bf16 %v1232
          %v1357 = vunpack.c.l.bf16 %v1233
          %v1358 = vunpack.c.h.bf16 %v1233
          %v1359 = vunpack.c.l.bf16 %v1234
          %v1360 = vunpack.c.h.bf16 %v1234
          %v1361 = vunpack.c.l.bf16 %v1235
          %v1362 = vunpack.c.h.bf16 %v1235
          %v1363 = vunpack.c.l.bf16 %v1236
          %v1364 = vunpack.c.h.bf16 %v1236
          %v1365 = vld [vmem:[%s6] sm:$0xff]
          %v1366 = vld [vmem:[%s6 + $0x8] sm:$0xff]
          %v1369 = vlaneseq
          %v1370 = vshrl.u32 %v1369, 7
          %v1371 = vsub.s32 0, %v1370
          %v1372 = vrot.slane %v1365, %v1371
          %v1373 = vlaneseq
          %v1374 = vshrl.u32 %v1373, 7
          %v1375 = vsub.s32 1, %v1374
          %v1376 = vrot.slane %v1365, %v1375
          %v1377 = vlaneseq
          %v1378 = vshrl.u32 %v1377, 7
          %v1379 = vsub.s32 2, %v1378
          %v1380 = vrot.slane %v1365, %v1379
          %v1381 = vlaneseq
          %v1382 = vshrl.u32 %v1381, 7
          %v1383 = vsub.s32 3, %v1382
          %v1384 = vrot.slane %v1365, %v1383
          %v1385 = vlaneseq
          %v1386 = vshrl.u32 %v1385, 7
          %v1387 = vsub.s32 4, %v1386
          %v1388 = vrot.slane %v1365, %v1387
          %v1389 = vlaneseq
          %v1390 = vshrl.u32 %v1389, 7
          %v1391 = vsub.s32 5, %v1390
          %v1392 = vrot.slane %v1365, %v1391
          %v1393 = vlaneseq
          %v1394 = vshrl.u32 %v1393, 7
          %v1395 = vsub.s32 6, %v1394
          %v1396 = vrot.slane %v1365, %v1395
          %v1397 = vlaneseq
          %v1398 = vshrl.u32 %v1397, 7
          %v1399 = vsub.s32 7, %v1398
          %v1400 = vrot.slane %v1365, %v1399
          %v1401 = vlaneseq
          %v1402 = vshrl.u32 %v1401, 7
          %v1403 = vsub.s32 0, %v1402
          %v1404 = vrot.slane %v1366, %v1403
          %v1405 = vlaneseq
          %v1406 = vshrl.u32 %v1405, 7
          %v1407 = vsub.s32 1, %v1406
          %v1408 = vrot.slane %v1366, %v1407
          %v1409 = vlaneseq
          %v1410 = vshrl.u32 %v1409, 7
          %v1411 = vsub.s32 2, %v1410
          %v1412 = vrot.slane %v1366, %v1411
          %v1413 = vlaneseq
          %v1414 = vshrl.u32 %v1413, 7
          %v1415 = vsub.s32 3, %v1414
          %v1416 = vrot.slane %v1366, %v1415
          %v1417 = vlaneseq
          %v1418 = vshrl.u32 %v1417, 7
          %v1419 = vsub.s32 4, %v1418
          %v1420 = vrot.slane %v1366, %v1419
          %v1421 = vlaneseq
          %v1422 = vshrl.u32 %v1421, 7
          %v1423 = vsub.s32 5, %v1422
          %v1424 = vrot.slane %v1366, %v1423
          %v1425 = vlaneseq
          %v1426 = vshrl.u32 %v1425, 7
          %v1427 = vsub.s32 6, %v1426
          %v1428 = vrot.slane %v1366, %v1427
          %v1429 = vlaneseq
          %v1430 = vshrl.u32 %v1429, 7
          %v1431 = vsub.s32 7, %v1430
          %v1432 = vrot.slane %v1366, %v1431
          %vm1449 = vcmask 523264
          %v1451 = vsel %vm1449, %v1172, 0
          %1453 = vmatprep.subr.mxu0 0.0
          %1454 = vmatpush1.msra.mxu0 0.0
          %1455 = vmatprep.subr.mxu0 0.0
          %1456 = vmatpush1.msra.mxu0 0.0
          %1457 = vmatprep.subr.mxu0 0.0
          %1458 = vmatpush1.msra.mxu0 0.0
          %1459 = vmatprep.subr.mxu0 0.0
          %1460 = vmatpush1.msra.mxu0 0.0
          %1461 = vmatprep.subr.mxu0 0.0
          %1462 = vmatpush1.msra.mxu0 0.0
          %1463 = vmatprep.subr.mxu0 0.0
          %1464 = vmatpush1.msra.mxu0 0.0
          %1465 = vmatprep.subr.mxu0 0.0
          %1466 = vmatpush1.msra.mxu0 0.0
          %1467 = vmatprep.subr.mxu0 0.0
          %1468 = vmatpush1.msra.mxu0 0.0
          %1469 = vmatprep.subr.mxu0 %v1350
          %1470 = vmatpush1.msra.mxu0 %v1349
          %1471 = vmatprep.subr.mxu0 %v1334
          %1472 = vmatpush1.msra.mxu0 %v1333
          %1473 = vmatprep.subr.mxu0 %v1318
          %1474 = vmatpush1.msra.mxu0 %v1317
          %1475 = vmatprep.subr.mxu0 %v1302
          %1476 = vmatpush1.msra.mxu0 %v1301
          %1477 = vmatprep.subr.mxu0 %v1286
          %1478 = vmatpush1.msra.mxu0 %v1285
          %1479 = vmatprep.subr.mxu0 %v1270
          %1480 = vmatpush1.msra.mxu0 %v1269
          %1481 = vmatprep.subr.mxu0 %v1254
          %1482 = vmatpush1.msra.mxu0 %v1253
          %1483 = vmatprep.subr.mxu0 %v1238
          %1484 = vmatpush1.msra.mxu0 %v1237
          %1485 = vmatprep.subr.mxu0 0.0
          %1486 = vmatpush2.msra.mxu0 0.0
          %1487 = vmatprep.subr.mxu0 0.0
          %1488 = vmatpush2.msra.mxu0 0.0
          %1489 = vmatprep.subr.mxu0 0.0
          %1490 = vmatpush2.msra.mxu0 0.0
          %1491 = vmatprep.subr.mxu0 0.0
          %1492 = vmatpush2.msra.mxu0 0.0
          %1493 = vmatprep.subr.mxu0 0.0
          %1494 = vmatpush2.msra.mxu0 0.0
          %1495 = vmatprep.subr.mxu0 0.0
          %1496 = vmatpush2.msra.mxu0 0.0
          %1497 = vmatprep.subr.mxu0 0.0
          %1498 = vmatpush2.msra.mxu0 0.0
          %1499 = vmatprep.subr.mxu0 0.0
          %1500 = vmatpush2.msra.mxu0 0.0
          %1501 = vmatprep.subr.mxu0 0.0
          %1502 = vmatpush2.msra.mxu0 0.0
          %1503 = vmatprep.subr.mxu0 0.0
          %1504 = vmatpush2.msra.mxu0 0.0
          %1505 = vmatprep.subr.mxu0 0.0
          %1506 = vmatpush2.msra.mxu0 0.0
          %1507 = vmatprep.subr.mxu0 0.0
          %1508 = vmatpush2.msra.mxu0 0.0
          %1509 = vmatprep.subr.mxu0 0.0
          %1510 = vmatpush2.msra.mxu0 0.0
          %1511 = vmatprep.subr.mxu0 0.0
          %1512 = vmatpush2.msra.mxu0 0.0
          %1513 = vmatprep.subr.mxu0 0.0
          %1514 = vmatpush2.msra.mxu0 0.0
          %1515 = vmatprep.subr.mxu0 0.0
          %1516 = vmatpush2.msra.mxu0 0.0
          %1517 = vmatprep.mubr.f32.mxu0 0.0
          %1518 = vmatmul.mubr.f32.gmra.mxu0 %v1451
          %v1519 = vpop.f32.mrf.mxu0
          %v1520 = vadd.f32 %v1372, %v1519
          %v1521 = vpop.f32.mrf.mxu0
          %v1522 = vadd.f32 %v1376, %v1521
          %1523 = vdwg.mxu0
          %1524 = vmatprep.subr.mxu0 0.0
          %1525 = vmatpush1.msra.mxu0 0.0
          %1526 = vmatprep.subr.mxu0 0.0
          %1527 = vmatpush1.msra.mxu0 0.0
          %1528 = vmatprep.subr.mxu0 0.0
          %1529 = vmatpush1.msra.mxu0 0.0
          %1530 = vmatprep.subr.mxu0 0.0
          %1531 = vmatpush1.msra.mxu0 0.0
          %1532 = vmatprep.subr.mxu0 0.0
          %1533 = vmatpush1.msra.mxu0 0.0
          %1534 = vmatprep.subr.mxu0 0.0
          %1535 = vmatpush1.msra.mxu0 0.0
          %1536 = vmatprep.subr.mxu0 0.0
          %1537 = vmatpush1.msra.mxu0 0.0
          %1538 = vmatprep.subr.mxu0 0.0
          %1539 = vmatpush1.msra.mxu0 0.0
          %1540 = vmatprep.subr.mxu0 %v1352
          %1541 = vmatpush1.msra.mxu0 %v1351
          %1542 = vmatprep.subr.mxu0 %v1336
          %1543 = vmatpush1.msra.mxu0 %v1335
          %1544 = vmatprep.subr.mxu0 %v1320
          %1545 = vmatpush1.msra.mxu0 %v1319
          %1546 = vmatprep.subr.mxu0 %v1304
          %1547 = vmatpush1.msra.mxu0 %v1303
          %1548 = vmatprep.subr.mxu0 %v1288
          %1549 = vmatpush1.msra.mxu0 %v1287
          %1550 = vmatprep.subr.mxu0 %v1272
          %1551 = vmatpush1.msra.mxu0 %v1271
          %1552 = vmatprep.subr.mxu0 %v1256
          %1553 = vmatpush1.msra.mxu0 %v1255
          %1554 = vmatprep.subr.mxu0 %v1240
          %1555 = vmatpush1.msra.mxu0 %v1239
          %1556 = vmatprep.subr.mxu0 0.0
          %1557 = vmatpush2.msra.mxu0 0.0
          %1558 = vmatprep.subr.mxu0 0.0
          %1559 = vmatpush2.msra.mxu0 0.0
          %1560 = vmatprep.subr.mxu0 0.0
          %1561 = vmatpush2.msra.mxu0 0.0
          %1562 = vmatprep.subr.mxu0 0.0
          %1563 = vmatpush2.msra.mxu0 0.0
          %1564 = vmatprep.subr.mxu0 0.0
          %1565 = vmatpush2.msra.mxu0 0.0
          %1566 = vmatprep.subr.mxu0 0.0
          %1567 = vmatpush2.msra.mxu0 0.0
          %1568 = vmatprep.subr.mxu0 0.0
          %1569 = vmatpush2.msra.mxu0 0.0
          %1570 = vmatprep.subr.mxu0 0.0
          %1571 = vmatpush2.msra.mxu0 0.0
          %1572 = vmatprep.subr.mxu0 0.0
          %1573 = vmatpush2.msra.mxu0 0.0
          %1574 = vmatprep.subr.mxu0 0.0
          %1575 = vmatpush2.msra.mxu0 0.0
          %1576 = vmatprep.subr.mxu0 0.0
          %1577 = vmatpush2.msra.mxu0 0.0
          %1578 = vmatprep.subr.mxu0 0.0
          %1579 = vmatpush2.msra.mxu0 0.0
          %1580 = vmatprep.subr.mxu0 0.0
          %1581 = vmatpush2.msra.mxu0 0.0
          %1582 = vmatprep.subr.mxu0 0.0
          %1583 = vmatpush2.msra.mxu0 0.0
          %1584 = vmatprep.subr.mxu0 0.0
          %1585 = vmatpush2.msra.mxu0 0.0
          %1586 = vmatprep.subr.mxu0 0.0
          %1587 = vmatpush2.msra.mxu0 0.0
          %1588 = vmatprep.mubr.f32.mxu0 0.0
          %1589 = vmatmul.mubr.f32.gmra.mxu0 %v1451
          %v1590 = vpop.f32.mrf.mxu0
          %v1591 = vadd.f32 %v1380, %v1590
          %v1592 = vpop.f32.mrf.mxu0
          %v1593 = vadd.f32 %v1384, %v1592
          %1594 = vdwg.mxu0
          %1595 = vmatprep.subr.mxu0 0.0
          %1596 = vmatpush1.msra.mxu0 0.0
          %1597 = vmatprep.subr.mxu0 0.0
          %1598 = vmatpush1.msra.mxu0 0.0
          %1599 = vmatprep.subr.mxu0 0.0
          %1600 = vmatpush1.msra.mxu0 0.0
          %1601 = vmatprep.subr.mxu0 0.0
          %1602 = vmatpush1.msra.mxu0 0.0
          %1603 = vmatprep.subr.mxu0 0.0
          %1604 = vmatpush1.msra.mxu0 0.0
          %1605 = vmatprep.subr.mxu0 0.0
          %1606 = vmatpush1.msra.mxu0 0.0
          %1607 = vmatprep.subr.mxu0 0.0
          %1608 = vmatpush1.msra.mxu0 0.0
          %1609 = vmatprep.subr.mxu0 0.0
          %1610 = vmatpush1.msra.mxu0 0.0
          %1611 = vmatprep.subr.mxu0 %v1354
          %1612 = vmatpush1.msra.mxu0 %v1353
          %1613 = vmatprep.subr.mxu0 %v1338
          %1614 = vmatpush1.msra.mxu0 %v1337
          %1615 = vmatprep.subr.mxu0 %v1322
          %1616 = vmatpush1.msra.mxu0 %v1321
          %1617 = vmatprep.subr.mxu0 %v1306
          %1618 = vmatpush1.msra.mxu0 %v1305
          %1619 = vmatprep.subr.mxu0 %v1290
          %1620 = vmatpush1.msra.mxu0 %v1289
          %1621 = vmatprep.subr.mxu0 %v1274
          %1622 = vmatpush1.msra.mxu0 %v1273
          %1623 = vmatprep.subr.mxu0 %v1258
          %1624 = vmatpush1.msra.mxu0 %v1257
          %1625 = vmatprep.subr.mxu0 %v1242
          %1626 = vmatpush1.msra.mxu0 %v1241
          %1627 = vmatprep.subr.mxu0 0.0
          %1628 = vmatpush2.msra.mxu0 0.0
          %1629 = vmatprep.subr.mxu0 0.0
          %1630 = vmatpush2.msra.mxu0 0.0
          %1631 = vmatprep.subr.mxu0 0.0
          %1632 = vmatpush2.msra.mxu0 0.0
          %1633 = vmatprep.subr.mxu0 0.0
          %1634 = vmatpush2.msra.mxu0 0.0
          %1635 = vmatprep.subr.mxu0 0.0
          %1636 = vmatpush2.msra.mxu0 0.0
          %1637 = vmatprep.subr.mxu0 0.0
          %1638 = vmatpush2.msra.mxu0 0.0
          %1639 = vmatprep.subr.mxu0 0.0
          %1640 = vmatpush2.msra.mxu0 0.0
          %1641 = vmatprep.subr.mxu0 0.0
          %1642 = vmatpush2.msra.mxu0 0.0
          %1643 = vmatprep.subr.mxu0 0.0
          %1644 = vmatpush2.msra.mxu0 0.0
          %1645 = vmatprep.subr.mxu0 0.0
          %1646 = vmatpush2.msra.mxu0 0.0
          %1647 = vmatprep.subr.mxu0 0.0
          %1648 = vmatpush2.msra.mxu0 0.0
          %1649 = vmatprep.subr.mxu0 0.0
          %1650 = vmatpush2.msra.mxu0 0.0
          %1651 = vmatprep.subr.mxu0 0.0
          %1652 = vmatpush2.msra.mxu0 0.0
          %1653 = vmatprep.subr.mxu0 0.0
          %1654 = vmatpush2.msra.mxu0 0.0
          %1655 = vmatprep.subr.mxu0 0.0
          %1656 = vmatpush2.msra.mxu0 0.0
          %1657 = vmatprep.subr.mxu0 0.0
          %1658 = vmatpush2.msra.mxu0 0.0
          %1659 = vmatprep.mubr.f32.mxu0 0.0
          %1660 = vmatmul.mubr.f32.gmra.mxu0 %v1451
          %v1661 = vpop.f32.mrf.mxu0
          %v1662 = vadd.f32 %v1388, %v1661
          %v1663 = vpop.f32.mrf.mxu0
          %v1664 = vadd.f32 %v1392, %v1663
          %1665 = vdwg.mxu0
          %1666 = vmatprep.subr.mxu0 0.0
          %1667 = vmatpush1.msra.mxu0 0.0
          %1668 = vmatprep.subr.mxu0 0.0
          %1669 = vmatpush1.msra.mxu0 0.0
          %1670 = vmatprep.subr.mxu0 0.0
          %1671 = vmatpush1.msra.mxu0 0.0
          %1672 = vmatprep.subr.mxu0 0.0
          %1673 = vmatpush1.msra.mxu0 0.0
          %1674 = vmatprep.subr.mxu0 0.0
          %1675 = vmatpush1.msra.mxu0 0.0
          %1676 = vmatprep.subr.mxu0 0.0
          %1677 = vmatpush1.msra.mxu0 0.0
          %1678 = vmatprep.subr.mxu0 0.0
          %1679 = vmatpush1.msra.mxu0 0.0
          %1680 = vmatprep.subr.mxu0 0.0
          %1681 = vmatpush1.msra.mxu0 0.0
          %1682 = vmatprep.subr.mxu0 %v1356
          %1683 = vmatpush1.msra.mxu0 %v1355
          %1684 = vmatprep.subr.mxu0 %v1340
          %1685 = vmatpush1.msra.mxu0 %v1339
          %1686 = vmatprep.subr.mxu0 %v1324
          %1687 = vmatpush1.msra.mxu0 %v1323
          %1688 = vmatprep.subr.mxu0 %v1308
          %1689 = vmatpush1.msra.mxu0 %v1307
          %1690 = vmatprep.subr.mxu0 %v1292
          %1691 = vmatpush1.msra.mxu0 %v1291
          %1692 = vmatprep.subr.mxu0 %v1276
          %1693 = vmatpush1.msra.mxu0 %v1275
          %1694 = vmatprep.subr.mxu0 %v1260
          %1695 = vmatpush1.msra.mxu0 %v1259
          %1696 = vmatprep.subr.mxu0 %v1244
          %1697 = vmatpush1.msra.mxu0 %v1243
          %1698 = vmatprep.subr.mxu0 0.0
          %1699 = vmatpush2.msra.mxu0 0.0
          %1700 = vmatprep.subr.mxu0 0.0
          %1701 = vmatpush2.msra.mxu0 0.0
          %1702 = vmatprep.subr.mxu0 0.0
          %1703 = vmatpush2.msra.mxu0 0.0
          %1704 = vmatprep.subr.mxu0 0.0
          %1705 = vmatpush2.msra.mxu0 0.0
          %1706 = vmatprep.subr.mxu0 0.0
          %1707 = vmatpush2.msra.mxu0 0.0
          %1708 = vmatprep.subr.mxu0 0.0
          %1709 = vmatpush2.msra.mxu0 0.0
          %1710 = vmatprep.subr.mxu0 0.0
          %1711 = vmatpush2.msra.mxu0 0.0
          %1712 = vmatprep.subr.mxu0 0.0
          %1713 = vmatpush2.msra.mxu0 0.0
          %1714 = vmatprep.subr.mxu0 0.0
          %1715 = vmatpush2.msra.mxu0 0.0
          %1716 = vmatprep.subr.mxu0 0.0
          %1717 = vmatpush2.msra.mxu0 0.0
          %1718 = vmatprep.subr.mxu0 0.0
          %1719 = vmatpush2.msra.mxu0 0.0
          %1720 = vmatprep.subr.mxu0 0.0
          %1721 = vmatpush2.msra.mxu0 0.0
          %1722 = vmatprep.subr.mxu0 0.0
          %1723 = vmatpush2.msra.mxu0 0.0
          %1724 = vmatprep.subr.mxu0 0.0
          %1725 = vmatpush2.msra.mxu0 0.0
          %1726 = vmatprep.subr.mxu0 0.0
          %1727 = vmatpush2.msra.mxu0 0.0
          %1728 = vmatprep.subr.mxu0 0.0
          %1729 = vmatpush2.msra.mxu0 0.0
          %1730 = vmatprep.mubr.f32.mxu0 0.0
          %1731 = vmatmul.mubr.f32.gmra.mxu0 %v1451
          %v1732 = vpop.f32.mrf.mxu0
          %v1733 = vadd.f32 %v1396, %v1732
          %v1734 = vpop.f32.mrf.mxu0
          %v1735 = vadd.f32 %v1400, %v1734
          %1736 = vdwg.mxu0
          %1737 = vmatprep.subr.mxu0 0.0
          %1738 = vmatpush1.msra.mxu0 0.0
          %1739 = vmatprep.subr.mxu0 0.0
          %1740 = vmatpush1.msra.mxu0 0.0
          %1741 = vmatprep.subr.mxu0 0.0
          %1742 = vmatpush1.msra.mxu0 0.0
          %1743 = vmatprep.subr.mxu0 0.0
          %1744 = vmatpush1.msra.mxu0 0.0
          %1745 = vmatprep.subr.mxu0 0.0
          %1746 = vmatpush1.msra.mxu0 0.0
          %1747 = vmatprep.subr.mxu0 0.0
          %1748 = vmatpush1.msra.mxu0 0.0
          %1749 = vmatprep.subr.mxu0 0.0
          %1750 = vmatpush1.msra.mxu0 0.0
          %1751 = vmatprep.subr.mxu0 0.0
          %1752 = vmatpush1.msra.mxu0 0.0
          %1753 = vmatprep.subr.mxu0 %v1358
          %1754 = vmatpush1.msra.mxu0 %v1357
          %1755 = vmatprep.subr.mxu0 %v1342
          %1756 = vmatpush1.msra.mxu0 %v1341
          %1757 = vmatprep.subr.mxu0 %v1326
          %1758 = vmatpush1.msra.mxu0 %v1325
          %1759 = vmatprep.subr.mxu0 %v1310
          %1760 = vmatpush1.msra.mxu0 %v1309
          %1761 = vmatprep.subr.mxu0 %v1294
          %1762 = vmatpush1.msra.mxu0 %v1293
          %1763 = vmatprep.subr.mxu0 %v1278
          %1764 = vmatpush1.msra.mxu0 %v1277
          %1765 = vmatprep.subr.mxu0 %v1262
          %1766 = vmatpush1.msra.mxu0 %v1261
          %1767 = vmatprep.subr.mxu0 %v1246
          %1768 = vmatpush1.msra.mxu0 %v1245
          %1769 = vmatprep.subr.mxu0 0.0
          %1770 = vmatpush2.msra.mxu0 0.0
          %1771 = vmatprep.subr.mxu0 0.0
          %1772 = vmatpush2.msra.mxu0 0.0
          %1773 = vmatprep.subr.mxu0 0.0
          %1774 = vmatpush2.msra.mxu0 0.0
          %1775 = vmatprep.subr.mxu0 0.0
          %1776 = vmatpush2.msra.mxu0 0.0
          %1777 = vmatprep.subr.mxu0 0.0
          %1778 = vmatpush2.msra.mxu0 0.0
          %1779 = vmatprep.subr.mxu0 0.0
          %1780 = vmatpush2.msra.mxu0 0.0
          %1781 = vmatprep.subr.mxu0 0.0
          %1782 = vmatpush2.msra.mxu0 0.0
          %1783 = vmatprep.subr.mxu0 0.0
          %1784 = vmatpush2.msra.mxu0 0.0
          %1785 = vmatprep.subr.mxu0 0.0
          %1786 = vmatpush2.msra.mxu0 0.0
          %1787 = vmatprep.subr.mxu0 0.0
          %1788 = vmatpush2.msra.mxu0 0.0
          %1789 = vmatprep.subr.mxu0 0.0
          %1790 = vmatpush2.msra.mxu0 0.0
          %1791 = vmatprep.subr.mxu0 0.0
          %1792 = vmatpush2.msra.mxu0 0.0
          %1793 = vmatprep.subr.mxu0 0.0
          %1794 = vmatpush2.msra.mxu0 0.0
          %1795 = vmatprep.subr.mxu0 0.0
          %1796 = vmatpush2.msra.mxu0 0.0
          %1797 = vmatprep.subr.mxu0 0.0
          %1798 = vmatpush2.msra.mxu0 0.0
          %1799 = vmatprep.subr.mxu0 0.0
          %1800 = vmatpush2.msra.mxu0 0.0
          %1801 = vmatprep.mubr.f32.mxu0 0.0
          %1802 = vmatmul.mubr.f32.gmra.mxu0 %v1451
          %v1803 = vpop.f32.mrf.mxu0
          %v1804 = vadd.f32 %v1404, %v1803
          %v1805 = vpop.f32.mrf.mxu0
          %v1806 = vadd.f32 %v1408, %v1805
          %1807 = vdwg.mxu0
          %1808 = vmatprep.subr.mxu0 0.0
          %1809 = vmatpush1.msra.mxu0 0.0
          %1810 = vmatprep.subr.mxu0 0.0
          %1811 = vmatpush1.msra.mxu0 0.0
          %1812 = vmatprep.subr.mxu0 0.0
          %1813 = vmatpush1.msra.mxu0 0.0
          %1814 = vmatprep.subr.mxu0 0.0
          %1815 = vmatpush1.msra.mxu0 0.0
          %1816 = vmatprep.subr.mxu0 0.0
          %1817 = vmatpush1.msra.mxu0 0.0
          %1818 = vmatprep.subr.mxu0 0.0
          %1819 = vmatpush1.msra.mxu0 0.0
          %1820 = vmatprep.subr.mxu0 0.0
          %1821 = vmatpush1.msra.mxu0 0.0
          %1822 = vmatprep.subr.mxu0 0.0
          %1823 = vmatpush1.msra.mxu0 0.0
          %1824 = vmatprep.subr.mxu0 %v1360
          %1825 = vmatpush1.msra.mxu0 %v1359
          %1826 = vmatprep.subr.mxu0 %v1344
          %1827 = vmatpush1.msra.mxu0 %v1343
          %1828 = vmatprep.subr.mxu0 %v1328
          %1829 = vmatpush1.msra.mxu0 %v1327
          %1830 = vmatprep.subr.mxu0 %v1312
          %1831 = vmatpush1.msra.mxu0 %v1311
          %1832 = vmatprep.subr.mxu0 %v1296
          %1833 = vmatpush1.msra.mxu0 %v1295
          %1834 = vmatprep.subr.mxu0 %v1280
          %1835 = vmatpush1.msra.mxu0 %v1279
          %1836 = vmatprep.subr.mxu0 %v1264
          %1837 = vmatpush1.msra.mxu0 %v1263
          %1838 = vmatprep.subr.mxu0 %v1248
          %1839 = vmatpush1.msra.mxu0 %v1247
          %1840 = vmatprep.subr.mxu0 0.0
          %1841 = vmatpush2.msra.mxu0 0.0
          %1842 = vmatprep.subr.mxu0 0.0
          %1843 = vmatpush2.msra.mxu0 0.0
          %1844 = vmatprep.subr.mxu0 0.0
          %1845 = vmatpush2.msra.mxu0 0.0
          %1846 = vmatprep.subr.mxu0 0.0
          %1847 = vmatpush2.msra.mxu0 0.0
          %1848 = vmatprep.subr.mxu0 0.0
          %1849 = vmatpush2.msra.mxu0 0.0
          %1850 = vmatprep.subr.mxu0 0.0
          %1851 = vmatpush2.msra.mxu0 0.0
          %1852 = vmatprep.subr.mxu0 0.0
          %1853 = vmatpush2.msra.mxu0 0.0
          %1854 = vmatprep.subr.mxu0 0.0
          %1855 = vmatpush2.msra.mxu0 0.0
          %1856 = vmatprep.subr.mxu0 0.0
          %1857 = vmatpush2.msra.mxu0 0.0
          %1858 = vmatprep.subr.mxu0 0.0
          %1859 = vmatpush2.msra.mxu0 0.0
          %1860 = vmatprep.subr.mxu0 0.0
          %1861 = vmatpush2.msra.mxu0 0.0
          %1862 = vmatprep.subr.mxu0 0.0
          %1863 = vmatpush2.msra.mxu0 0.0
          %1864 = vmatprep.subr.mxu0 0.0
          %1865 = vmatpush2.msra.mxu0 0.0
          %1866 = vmatprep.subr.mxu0 0.0
          %1867 = vmatpush2.msra.mxu0 0.0
          %1868 = vmatprep.subr.mxu0 0.0
          %1869 = vmatpush2.msra.mxu0 0.0
          %1870 = vmatprep.subr.mxu0 0.0
          %1871 = vmatpush2.msra.mxu0 0.0
          %1872 = vmatprep.mubr.f32.mxu0 0.0
          %1873 = vmatmul.mubr.f32.gmra.mxu0 %v1451
          %v1874 = vpop.f32.mrf.mxu0
          %v1875 = vadd.f32 %v1412, %v1874
          %v1876 = vpop.f32.mrf.mxu0
          %v1877 = vadd.f32 %v1416, %v1876
          %1878 = vdwg.mxu0
          %1879 = vmatprep.subr.mxu0 0.0
          %1880 = vmatpush1.msra.mxu0 0.0
          %1881 = vmatprep.subr.mxu0 0.0
          %1882 = vmatpush1.msra.mxu0 0.0
          %1883 = vmatprep.subr.mxu0 0.0
          %1884 = vmatpush1.msra.mxu0 0.0
          %1885 = vmatprep.subr.mxu0 0.0
          %1886 = vmatpush1.msra.mxu0 0.0
          %1887 = vmatprep.subr.mxu0 0.0
          %1888 = vmatpush1.msra.mxu0 0.0
          %1889 = vmatprep.subr.mxu0 0.0
          %1890 = vmatpush1.msra.mxu0 0.0
          %1891 = vmatprep.subr.mxu0 0.0
          %1892 = vmatpush1.msra.mxu0 0.0
          %1893 = vmatprep.subr.mxu0 0.0
          %1894 = vmatpush1.msra.mxu0 0.0
          %1895 = vmatprep.subr.mxu0 %v1362
          %1896 = vmatpush1.msra.mxu0 %v1361
          %1897 = vmatprep.subr.mxu0 %v1346
          %1898 = vmatpush1.msra.mxu0 %v1345
          %1899 = vmatprep.subr.mxu0 %v1330
          %1900 = vmatpush1.msra.mxu0 %v1329
          %1901 = vmatprep.subr.mxu0 %v1314
          %1902 = vmatpush1.msra.mxu0 %v1313
          %1903 = vmatprep.subr.mxu0 %v1298
          %1904 = vmatpush1.msra.mxu0 %v1297
          %1905 = vmatprep.subr.mxu0 %v1282
          %1906 = vmatpush1.msra.mxu0 %v1281
          %1907 = vmatprep.subr.mxu0 %v1266
          %1908 = vmatpush1.msra.mxu0 %v1265
          %1909 = vmatprep.subr.mxu0 %v1250
          %1910 = vmatpush1.msra.mxu0 %v1249
          %1911 = vmatprep.subr.mxu0 0.0
          %1912 = vmatpush2.msra.mxu0 0.0
          %1913 = vmatprep.subr.mxu0 0.0
          %1914 = vmatpush2.msra.mxu0 0.0
          %1915 = vmatprep.subr.mxu0 0.0
          %1916 = vmatpush2.msra.mxu0 0.0
          %1917 = vmatprep.subr.mxu0 0.0
          %1918 = vmatpush2.msra.mxu0 0.0
          %1919 = vmatprep.subr.mxu0 0.0
          %1920 = vmatpush2.msra.mxu0 0.0
          %1921 = vmatprep.subr.mxu0 0.0
          %1922 = vmatpush2.msra.mxu0 0.0
          %1923 = vmatprep.subr.mxu0 0.0
          %1924 = vmatpush2.msra.mxu0 0.0
          %1925 = vmatprep.subr.mxu0 0.0
          %1926 = vmatpush2.msra.mxu0 0.0
          %1927 = vmatprep.subr.mxu0 0.0
          %1928 = vmatpush2.msra.mxu0 0.0
          %1929 = vmatprep.subr.mxu0 0.0
          %1930 = vmatpush2.msra.mxu0 0.0
          %1931 = vmatprep.subr.mxu0 0.0
          %1932 = vmatpush2.msra.mxu0 0.0
          %1933 = vmatprep.subr.mxu0 0.0
          %1934 = vmatpush2.msra.mxu0 0.0
          %1935 = vmatprep.subr.mxu0 0.0
          %1936 = vmatpush2.msra.mxu0 0.0
          %1937 = vmatprep.subr.mxu0 0.0
          %1938 = vmatpush2.msra.mxu0 0.0
          %1939 = vmatprep.subr.mxu0 0.0
          %1940 = vmatpush2.msra.mxu0 0.0
          %1941 = vmatprep.subr.mxu0 0.0
          %1942 = vmatpush2.msra.mxu0 0.0
          %1943 = vmatprep.mubr.f32.mxu0 0.0
          %1944 = vmatmul.mubr.f32.gmra.mxu0 %v1451
          %v1945 = vpop.f32.mrf.mxu0
          %v1946 = vadd.f32 %v1420, %v1945
          %v1947 = vpop.f32.mrf.mxu0
          %v1948 = vadd.f32 %v1424, %v1947
          %1949 = vdwg.mxu0
          %1950 = vmatprep.subr.mxu0 0.0
          %1951 = vmatpush1.msra.mxu0 0.0
          %1952 = vmatprep.subr.mxu0 0.0
          %1953 = vmatpush1.msra.mxu0 0.0
          %1954 = vmatprep.subr.mxu0 0.0
          %1955 = vmatpush1.msra.mxu0 0.0
          %1956 = vmatprep.subr.mxu0 0.0
          %1957 = vmatpush1.msra.mxu0 0.0
          %1958 = vmatprep.subr.mxu0 0.0
          %1959 = vmatpush1.msra.mxu0 0.0
          %1960 = vmatprep.subr.mxu0 0.0
          %1961 = vmatpush1.msra.mxu0 0.0
          %1962 = vmatprep.subr.mxu0 0.0
          %1963 = vmatpush1.msra.mxu0 0.0
          %1964 = vmatprep.subr.mxu0 0.0
          %1965 = vmatpush1.msra.mxu0 0.0
          %1966 = vmatprep.subr.mxu0 %v1364
          %1967 = vmatpush1.msra.mxu0 %v1363
          %1968 = vmatprep.subr.mxu0 %v1348
          %1969 = vmatpush1.msra.mxu0 %v1347
          %1970 = vmatprep.subr.mxu0 %v1332
          %1971 = vmatpush1.msra.mxu0 %v1331
          %1972 = vmatprep.subr.mxu0 %v1316
          %1973 = vmatpush1.msra.mxu0 %v1315
          %1974 = vmatprep.subr.mxu0 %v1300
          %1975 = vmatpush1.msra.mxu0 %v1299
          %1976 = vmatprep.subr.mxu0 %v1284
          %1977 = vmatpush1.msra.mxu0 %v1283
          %1978 = vmatprep.subr.mxu0 %v1268
          %1979 = vmatpush1.msra.mxu0 %v1267
          %1980 = vmatprep.subr.mxu0 %v1252
          %1981 = vmatpush1.msra.mxu0 %v1251
          %1982 = vmatprep.subr.mxu0 0.0
          %1983 = vmatpush2.msra.mxu0 0.0
          %1984 = vmatprep.subr.mxu0 0.0
          %1985 = vmatpush2.msra.mxu0 0.0
          %1986 = vmatprep.subr.mxu0 0.0
          %1987 = vmatpush2.msra.mxu0 0.0
          %1988 = vmatprep.subr.mxu0 0.0
          %1989 = vmatpush2.msra.mxu0 0.0
          %1990 = vmatprep.subr.mxu0 0.0
          %1991 = vmatpush2.msra.mxu0 0.0
          %1992 = vmatprep.subr.mxu0 0.0
          %1993 = vmatpush2.msra.mxu0 0.0
          %1994 = vmatprep.subr.mxu0 0.0
          %1995 = vmatpush2.msra.mxu0 0.0
          %1996 = vmatprep.subr.mxu0 0.0
          %1997 = vmatpush2.msra.mxu0 0.0
          %1998 = vmatprep.subr.mxu0 0.0
          %1999 = vmatpush2.msra.mxu0 0.0
          %2000 = vmatprep.subr.mxu0 0.0
          %2001 = vmatpush2.msra.mxu0 0.0
          %2002 = vmatprep.subr.mxu0 0.0
          %2003 = vmatpush2.msra.mxu0 0.0
          %2004 = vmatprep.subr.mxu0 0.0
          %2005 = vmatpush2.msra.mxu0 0.0
          %2006 = vmatprep.subr.mxu0 0.0
          %2007 = vmatpush2.msra.mxu0 0.0
          %2008 = vmatprep.subr.mxu0 0.0
          %2009 = vmatpush2.msra.mxu0 0.0
          %2010 = vmatprep.subr.mxu0 0.0
          %2011 = vmatpush2.msra.mxu0 0.0
          %2012 = vmatprep.subr.mxu0 0.0
          %2013 = vmatpush2.msra.mxu0 0.0
          %2014 = vmatprep.mubr.f32.mxu0 0.0
          %2015 = vmatmul.mubr.f32.gmra.mxu0 %v1451
          %v2016 = vpop.f32.mrf.mxu0
          %v2017 = vadd.f32 %v1428, %v2016
          %v2018 = vpop.f32.mrf.mxu0
          %v2019 = vadd.f32 %v1432, %v2018
          %2020 = vdwg.mxu0
          %v2037 = vcombine.low %v1520, %v1522
          %v2038 = vcombine.low %v1591, %v1593
          %v2039 = vcombine.low %v1662, %v1664
          %v2040 = vcombine.low %v1733, %v1735
          %v2042 = vunpack.c.l.s4 1966171168
          %v2043 = vunpack.c.0.s8 %v2042
          %v2044 = vlaneseq
          %v2045 = vshrl.u32 %v2044, 7
          %v2046 = vsub.s32 %v2043, %v2045
          %v2047 = vrot.slane %v2037, %v2046
          %v2049 = vunpack.c.l.s4 1966171168
          %v2050 = vunpack.c.0.s8 %v2049
          %v2051 = vlaneseq
          %v2052 = vshrl.u32 %v2051, 7
          %v2053 = vsub.s32 %v2050, %v2052
          %v2054 = vrot.slane %v2038, %v2053
          %v2056 = vunpack.c.l.s4 1966171168
          %v2057 = vunpack.c.0.s8 %v2056
          %v2058 = vlaneseq
          %v2059 = vshrl.u32 %v2058, 7
          %v2060 = vsub.s32 %v2057, %v2059
          %v2061 = vrot.slane %v2039, %v2060
          %v2063 = vunpack.c.l.s4 1966171168
          %v2064 = vunpack.c.0.s8 %v2063
          %v2065 = vlaneseq
          %v2066 = vshrl.u32 %v2065, 7
          %v2067 = vsub.s32 %v2064, %v2066
          %v2068 = vrot.slane %v2040, %v2067
          %v2069 = vcombine.low %v2047, %v2054
          %v2070 = vcombine.low %v2061, %v2068
          %v2072 = vunpack.c.l.s4 1966171168
          %v2073 = vunpack.c.0.s8 %v2072
          %v2074 = vlaneseq
          %v2075 = vshrl.u32 %v2074, 7
          %v2076 = vsub.s32 %v2073, %v2075
          %v2077 = vrot.slane %v2069, %v2076
          %v2079 = vunpack.c.l.s4 1966171168
          %v2080 = vunpack.c.0.s8 %v2079
          %v2081 = vlaneseq
          %v2082 = vshrl.u32 %v2081, 7
          %v2083 = vsub.s32 %v2080, %v2082
          %v2084 = vrot.slane %v2070, %v2083
          %v2085 = vcombine.low %v2077, %v2084
          %v2086 = vcombine.low %v1804, %v1806
          %v2087 = vcombine.low %v1875, %v1877
          %v2088 = vcombine.low %v1946, %v1948
          %v2089 = vcombine.low %v2017, %v2019
          %v2091 = vunpack.c.l.s4 1966171168
          %v2092 = vunpack.c.0.s8 %v2091
          %v2093 = vlaneseq
          %v2094 = vshrl.u32 %v2093, 7
          %v2095 = vsub.s32 %v2092, %v2094
          %v2096 = vrot.slane %v2086, %v2095
          %v2098 = vunpack.c.l.s4 1966171168
          %v2099 = vunpack.c.0.s8 %v2098
          %v2100 = vlaneseq
          %v2101 = vshrl.u32 %v2100, 7
          %v2102 = vsub.s32 %v2099, %v2101
          %v2103 = vrot.slane %v2087, %v2102
          %v2105 = vunpack.c.l.s4 1966171168
          %v2106 = vunpack.c.0.s8 %v2105
          %v2107 = vlaneseq
          %v2108 = vshrl.u32 %v2107, 7
          %v2109 = vsub.s32 %v2106, %v2108
          %v2110 = vrot.slane %v2088, %v2109
          %v2112 = vunpack.c.l.s4 1966171168
          %v2113 = vunpack.c.0.s8 %v2112
          %v2114 = vlaneseq
          %v2115 = vshrl.u32 %v2114, 7
          %v2116 = vsub.s32 %v2113, %v2115
          %v2117 = vrot.slane %v2089, %v2116
          %v2118 = vcombine.low %v2096, %v2103
          %v2119 = vcombine.low %v2110, %v2117
          %v2121 = vunpack.c.l.s4 1966171168
          %v2122 = vunpack.c.0.s8 %v2121
          %v2123 = vlaneseq
          %v2124 = vshrl.u32 %v2123, 7
          %v2125 = vsub.s32 %v2122, %v2124
          %v2126 = vrot.slane %v2118, %v2125
          %v2128 = vunpack.c.l.s4 1966171168
          %v2129 = vunpack.c.0.s8 %v2128
          %v2130 = vlaneseq
          %v2131 = vshrl.u32 %v2130, 7
          %v2132 = vsub.s32 %v2129, %v2131
          %v2133 = vrot.slane %v2119, %v2132
          %v2134 = vcombine.low %v2126, %v2133
          %2137 = vst [vmem:[#allocation8] sm:$0xff] %v2085
          %2138 = vst [vmem:[#allocation8 + $0x8] sm:$0xff] %v2134
        $region64: #{tpu_custom_call.1} parent=47 // pred_fallthru
          _
        // Predicated region
        $region65: #{tpu_custom_call.1} parent=47 // pred_check
          %p2139 = pneg %p188
        $region66: #{tpu_custom_call.1} parent=47 // pred_check_branch
          %2141 = sbr.rel (%p2139) target = $region68
        $region67: #{tpu_custom_call.1} parent=47 // pred_region
          %s2143 = ssub.s32 256, 256
          %2144 = vsyncadd [#allocation5], %s2143
          %s2146 = sshll.u32 [#allocation8], 4
          %s2147 = int_to_ptr.vmem [resolvable:$true] %s2146
          %2149 = dma.vmem_to_hbm [thread:$0]  %s2147, 256, %s7, [#allocation5]
        $region68: #{tpu_custom_call.1} parent=47 // pred_fallthru
          _
        // Predicated region
        $region69: #{tpu_custom_call.1} parent=47 // pred_check
          %p2150 = pneg %p188
        $region70: #{tpu_custom_call.1} parent=47 // pred_check_branch
          %2152 = sbr.rel (%p2150) target = $region72
        $region71: #{tpu_custom_call.1} parent=47 // pred_region
          %2153 = dma.done [#allocation5], 256
        $region72: #{tpu_custom_call.1} parent=47 // pred_fallthru
          _
      $region48: #{tpu_custom_call.1} parent=5 // pred_fallthru
        _
      %p2154 = scmp.le.s32.totalorder 2, %s18
      // Predicated region
      $region73: #{tpu_custom_call.1} parent=5 // pred_check
        %p2155 = pneg %p2154
      $region74: #{tpu_custom_call.1} parent=5 // pred_check_branch
        %2157 = sbr.rel (%p2155) target = $region76
      $region75: #{tpu_custom_call.1} parent=5 // pred_region
        %s2158 = ssub.s32 %s18, 2
      $region76: #{tpu_custom_call.1} parent=5 // pred_fallthru
        _
    $region6: #{tpu_custom_call.1} parent=1 // loop_footer
      %s22 = sadd.s32 1, %s18
    $region7: #{tpu_custom_call.1} parent=1 // loop_footer_branch
      %17 = sbr.rel target = $region3
    $region8: #{tpu_custom_call.1} parent=1 // loop_exit
      _
    %2159 = vsyncpa [#allocation4], 1
    %s2160 = scalar_lea.sflag [#allocation4], 1
    %2161 = vsyncpa %s2160, 1
    %2162 = vsyncpa [#allocation7], 1
    %2163 = vsyncpa [#allocation5], 1
    %s2164 = scalar_lea.sflag [#allocation5], 1
    %2165 = vsyncpa %s2164, 1

</llo_original>
